<compile_context>
chip_gen: v6e
topology: v6e:2x2x1
jax: 0.10.0
libtpu: 0.0.40
codegen_flags: <defaults>
</compile_context>

<pallas_src>
import functools

import jax
import jax.numpy as jnp
from jax.experimental import pallas as pl
from jax.experimental.pallas import tpu as pltpu


def _round_up(x, m):
    return ((x + m - 1) // m) * m


def _mha_kernel(qkv_ref, w_ref, wo_ref, o_ref, *, num_head, dk, dkp, dvp):
    """One grid step == one batch element.

    qkv_ref: [3, S, D]              stacked Q/K/V rows for this batch element
    w_ref:   [D, 2*H*dkp + H*dvp]   fused (WQ | WK | WV); heads along lanes,
                                    per-head width zero-padded to 128
    wo_ref:  [H*dvp, DP]            output projection, rows/cols zero-padded
    o_ref:   [S, DP]                lane-dense output slab (DP = 128)
    """
    H = num_head
    scale = 1.0 / jnp.sqrt(jnp.float32(dk))     # TRUE dk (=10), not the padded one

    # Static, 128-aligned lane slices of the fused weight block -> free.
    wq = w_ref[:, : H * dkp]
    wk = w_ref[:, H * dkp: 2 * H * dkp]
    wv = w_ref[:, 2 * H * dkp:]

    # Fused projections: one lane-dense MXU op each, covering every head.
    # TODO(synk): at realistic sizes cast MXU operands to bfloat16 (keep
    # preferred_element_type=f32) for v6e/v7x throughput; kept f32 here to
    # preserve the tight toy-size tolerance.
    q_all = jnp.dot(qkv_ref[0], wq, preferred_element_type=jnp.float32)  # [S, H*dkp]
    k_all = jnp.dot(qkv_ref[1], wk, preferred_element_type=jnp.float32)  # [S, H*dkp]
    v_all = jnp.dot(qkv_ref[2], wv, preferred_element_type=jnp.float32)  # [S, H*dvp]

    heads = []
    for h in range(H):              # static unroll, H is tiny
        # dkp = dvp = 128 -> every slice is vreg-aligned (no lane relayout).
        qh = q_all[:, h * dkp:(h + 1) * dkp]
        kh = k_all[:, h * dkp:(h + 1) * dkp]
        vh = v_all[:, h * dvp:(h + 1) * dvp]

        # scores = qh @ kh^T : contract last dims, no materialized transpose.
        s = jax.lax.dot_general(
            qh, kh, (((1,), (1,)), ((), ())),
            preferred_element_type=jnp.float32) * scale          # [S, S]

        s_max = jnp.max(s, axis=-1, keepdims=True)
        p = jnp.exp(s - s_max)
        denom = jnp.sum(p, axis=-1, keepdims=True)
        p = p * pl.reciprocal(denom, approx=True)   # EUP slot, ~free

        heads.append(jnp.dot(p, vh, preferred_element_type=jnp.float32))  # [S, dvp]

    # 128-aligned pieces -> concat is pure vreg placement (no relayout), and
    # concat(heads) @ WO collapses H matmuls + (H-1) adds into ONE contraction.
    slab = jnp.concatenate(heads, axis=-1)                        # [S, H*dvp]
    o_ref[...] = jnp.dot(slab, wo_ref[...],
                         preferred_element_type=jnp.float32).astype(o_ref.dtype)


def _prep_weights(WQ, WK, WV, WO, dkp, dvp, dp):
    H, D, dk = WQ.shape
    dv = WV.shape[-1]

    def fuse(W, pad_to):
        # [H, D, w] -> zero-pad per-head width -> [D, H*pad_to] (heads on lanes)
        Wp = jnp.pad(W, ((0, 0), (0, 0), (0, pad_to - W.shape[-1])))
        return jnp.transpose(Wp, (1, 0, 2)).reshape(D, H * pad_to)

    # Single fused input-projection weight: (WQ | WK | WV) along lanes.
    w_in = jnp.concatenate([fuse(WQ, dkp), fuse(WK, dkp), fuse(WV, dvp)], axis=-1)

    # Output projection: head-major rows padded dv->dvp, cols D->dp, flattened.
    WOh = WO.reshape(H, dv, D)
    WOp = jnp.pad(WOh, ((0, 0), (0, dvp - dv), (0, dp - D))).reshape(H * dvp, dp)
    return w_in, WOp


def multi_head_attention(Q, K, V, WQ, WK, WV, WO):
    B, S, D = Q.shape
    H, _, dk = WQ.shape
    dv = WV.shape[-1]

    lane = 128
    dkp = _round_up(dk, lane)     # per-head width padded to a full vreg lane group
    dvp = _round_up(dv, lane)
    dp = _round_up(D, lane)       # lane-dense output slab; sliced back to D below
    rows = B * S

    # Single stacked QKV operand (fewer pallas_call inputs -> less DMA overhead).
    qkv = jnp.stack(
        [Q.reshape(rows, D), K.reshape(rows, D), V.reshape(rows, D)], axis=0)

    w_in, WOp = _prep_weights(WQ, WK, WV, WO, dkp, dvp, dp)
    w_in_cols = 2 * H * dkp + H * dvp

    kernel = functools.partial(_mha_kernel, num_head=H, dk=dk, dkp=dkp, dvp=dvp)

    out = pl.pallas_call(
        kernel,
        out_shape=jax.ShapeDtypeStruct((rows, dp), jnp.float32),
        grid=(B,),
        in_specs=[
            pl.BlockSpec((3, S, D), lambda b: (0, b, 0)),          # stacked QKV rows
            pl.BlockSpec((D, w_in_cols), lambda b: (0, 0)),        # fused WQ|WK|WV
            pl.BlockSpec((H * dvp, dp), lambda b: (0, 0)),         # padded WO
        ],
        out_specs=pl.BlockSpec((S, dp), lambda b: (b, 0)),
        compiler_params=pltpu.CompilerParams(
            dimension_semantics=("parallel",)),                    # v7x: 2 TCs
    )(qkv, w_in, WOp)

    return out.reshape(B, S, dp)[:, :, :D]


def _xavier_uniform(key, shape):
    # Match torch.nn.init.xavier_uniform_ fan computation.
    if len(shape) == 2:
        fan_in, fan_out = shape[1], shape[0]
    else:
        rf = 1
        for d in shape[2:]:
            rf *= d
        fan_in, fan_out = shape[1] * rf, shape[0] * rf
    bound = jnp.sqrt(6.0 / (fan_in + fan_out))
    return jax.random.uniform(key, shape, jnp.float32, minval=-bound, maxval=bound)


def _reference(Q, K, V, WQ, WK, WV, WO, dk):
    # Pure-JAX reference mirroring the PyTorch forward.
    heads = []
    H = WQ.shape[0]
    for h in range(H):
        q = jnp.einsum('bsd,dk->bsk', Q, WQ[h])
        k = jnp.einsum('bsd,dk->bsk', K, WK[h])
        v = jnp.einsum('bsd,dv->bsv', V, WV[h])
        s = jnp.einsum('bqk,bsk->bqs', q, k) / jnp.sqrt(jnp.float32(dk))
        p = jax.nn.softmax(s, axis=-1)
        heads.append(jnp.einsum('bqs,bsv->bqv', p, v))
    cat = jnp.concatenate(heads, axis=-1)
    return jnp.einsum('bse,ed->bsd', cat, WO)


if __name__ == "__main__":
    # Module hyperparameters (dk / dv hardwired by the PyTorch module)
    num_head = 4
    d_model = 32
    dk, dv = 10, 12

    # Small, forward-consistent shapes
    B, S = 2, 8

    key = jax.random.PRNGKey(0)
    k_q, k_k, k_v, k_wq, k_wk, k_wv, k_wo = jax.random.split(key, 7)

    Q = jax.random.normal(k_q, (B, S, d_model), jnp.float32)
    K = jax.random.normal(k_k, (B, S, d_model), jnp.float32)
    V = jax.random.normal(k_v, (B, S, d_model), jnp.float32)

    WQ = _xavier_uniform(k_wq, (num_head, d_model, dk))
    WK = _xavier_uniform(k_wk, (num_head, d_model, dk))
    WV = _xavier_uniform(k_wv, (num_head, d_model, dv))
    WO = _xavier_uniform(k_wo, (num_head * dv, d_model))

    out = multi_head_attention(Q, K, V, WQ, WK, WV, WO)
    out = jax.block_until_ready(out)

    ref = _reference(Q, K, V, WQ, WK, WV, WO, dk)
    assert out.shape == (B, S, d_model)
    # Tolerance covers f32 summation-order differences (fused WO contraction
    # vs. per-head einsum in the reference) and the EUP approx reciprocal
    # (~1e-5 relative) used for the softmax denominator.
    assert jnp.allclose(out, ref, atol=1e-3, rtol=1e-3), "mismatch vs reference"

    print("KERNEL_OK")
</pallas_src>

<mosaic_0001>
module attributes {stable_mosaic.version = 11 : i64} {
  func.func @_mha_kernel(%arg0: i32, %arg1: memref<3x8x32xf32, #tpu.memory_space<vmem>>, %arg2: memref<32x1536xf32, #tpu.memory_space<vmem>>, %arg3: memref<512x128xf32, #tpu.memory_space<vmem>>, %arg4: memref<8x128xf32, #tpu.memory_space<vmem>>) attributes {dimension_semantics = [#tpu.dimension_semantics<parallel>], iteration_bounds = array<i64: 2>, scalar_prefetch = 0 : i64, scratch_operands = 0 : i64, tpu.core_type = #tpu.core_type<tc>, window_params = [{transform_indices = @transform_0, window_bounds = array<i64: 3, 8, 32>}, {pipeline_mode = #tpu.pipeline_mode<synchronous>, transform_indices = @transform_1, window_bounds = array<i64: 32, 1536>}, {pipeline_mode = #tpu.pipeline_mode<synchronous>, transform_indices = @transform_2, window_bounds = array<i64: 512, 128>}, {transform_indices = @transform_3, window_bounds = array<i64: 8, 128>}]} {
    %cst = arith.constant 1.000000e+01 : f32
    %0 = math.sqrt %cst : f32
    %cst_0 = arith.constant 1.000000e+00 : f32
    %1 = arith.divf %cst_0, %0 : f32
    %c0 = arith.constant 0 : index
    %c0_1 = arith.constant 0 : index
    %2 = vector.load %arg2[%c0, %c0_1] : memref<32x1536xf32, #tpu.memory_space<vmem>>, vector<32x512xf32>
    %c0_2 = arith.constant 0 : index
    %c512 = arith.constant 512 : index
    %3 = vector.load %arg2[%c0_2, %c512] : memref<32x1536xf32, #tpu.memory_space<vmem>>, vector<32x512xf32>
    %c0_3 = arith.constant 0 : index
    %c1024 = arith.constant 1024 : index
    %4 = vector.load %arg2[%c0_3, %c1024] : memref<32x1536xf32, #tpu.memory_space<vmem>>, vector<32x512xf32>
    %c0_4 = arith.constant 0 : index
    %c0_5 = arith.constant 0 : index
    %c0_6 = arith.constant 0 : index
    %5 = vector.load %arg1[%c0_4, %c0_5, %c0_6] : memref<3x8x32xf32, #tpu.memory_space<vmem>>, vector<1x8x32xf32>
    %6 = vector.shape_cast %5 : vector<1x8x32xf32> to vector<8x32xf32>
    %cst_7 = arith.constant dense<0.000000e+00> : vector<8x512xf32>
    %7 = tpu.matmul %6, %2, %cst_7 {dimension_numbers = #tpu.dot_dimension_numbers<[1], [0], [0], [1], [0, 0, 1, 1], [], []>} : vector<8x32xf32>, vector<32x512xf32>, vector<8x512xf32> -> vector<8x512xf32>
    %c1 = arith.constant 1 : index
    %c0_8 = arith.constant 0 : index
    %c0_9 = arith.constant 0 : index
    %8 = vector.load %arg1[%c1, %c0_8, %c0_9] : memref<3x8x32xf32, #tpu.memory_space<vmem>>, vector<1x8x32xf32>
    %9 = vector.shape_cast %8 : vector<1x8x32xf32> to vector<8x32xf32>
    %cst_10 = arith.constant dense<0.000000e+00> : vector<8x512xf32>
    %10 = tpu.matmul %9, %3, %cst_10 {dimension_numbers = #tpu.dot_dimension_numbers<[1], [0], [0], [1], [0, 0, 1, 1], [], []>} : vector<8x32xf32>, vector<32x512xf32>, vector<8x512xf32> -> vector<8x512xf32>
    %c2 = arith.constant 2 : index
    %c0_11 = arith.constant 0 : index
    %c0_12 = arith.constant 0 : index
    %11 = vector.load %arg1[%c2, %c0_11, %c0_12] : memref<3x8x32xf32, #tpu.memory_space<vmem>>, vector<1x8x32xf32>
    %12 = vector.shape_cast %11 : vector<1x8x32xf32> to vector<8x32xf32>
    %cst_13 = arith.constant dense<0.000000e+00> : vector<8x512xf32>
    %13 = tpu.matmul %12, %4, %cst_13 {dimension_numbers = #tpu.dot_dimension_numbers<[1], [0], [0], [1], [0, 0, 1, 1], [], []>} : vector<8x32xf32>, vector<32x512xf32>, vector<8x512xf32> -> vector<8x512xf32>
    %14 = vector.extract_strided_slice %7 {offsets = [0, 0], sizes = [8, 128], strides = [1, 1]} : vector<8x512xf32> to vector<8x128xf32>
    %15 = vector.extract_strided_slice %10 {offsets = [0, 0], sizes = [8, 128], strides = [1, 1]} : vector<8x512xf32> to vector<8x128xf32>
    %16 = vector.extract_strided_slice %13 {offsets = [0, 0], sizes = [8, 128], strides = [1, 1]} : vector<8x512xf32> to vector<8x128xf32>
    %cst_14 = arith.constant dense<0.000000e+00> : vector<8x8xf32>
    %17 = tpu.matmul %14, %15, %cst_14 {dimension_numbers = #tpu.dot_dimension_numbers<[1], [1], [0], [0], [0, 0, 1, 0], [], []>} : vector<8x128xf32>, vector<8x128xf32>, vector<8x8xf32> -> vector<8x8xf32>
    %18 = vector.broadcast %1 : f32 to vector<8x8xf32>
    %19 = arith.mulf %17, %18 : vector<8x8xf32>
    %cst_15 = arith.constant dense<0xFF800000> : vector<8xf32>
    %20 = vector.multi_reduction <maximumf>, %19, %cst_15 [1] : vector<8x8xf32> to vector<8xf32>
    %21 = vector.shape_cast %20 : vector<8xf32> to vector<8x1xf32>
    %22 = vector.broadcast %21 : vector<8x1xf32> to vector<8x8xf32>
    %23 = arith.subf %19, %22 : vector<8x8xf32>
    %24 = math.exp %23 : vector<8x8xf32>
    %cst_16 = arith.constant dense<0.000000e+00> : vector<8xf32>
    %25 = vector.multi_reduction <add>, %24, %cst_16 [1] : vector<8x8xf32> to vector<8xf32>
    %26 = vector.shape_cast %25 : vector<8xf32> to vector<8x1xf32>
    %27 = tpu.reciprocal %26 {approx = true} : vector<8x1xf32> -> vector<8x1xf32>
    %28 = vector.broadcast %27 : vector<8x1xf32> to vector<8x8xf32>
    %29 = arith.mulf %24, %28 : vector<8x8xf32>
    %cst_17 = arith.constant dense<0.000000e+00> : vector<8x128xf32>
    %30 = tpu.matmul %29, %16, %cst_17 {dimension_numbers = #tpu.dot_dimension_numbers<[1], [0], [0], [1], [0, 0, 1, 1], [], []>} : vector<8x8xf32>, vector<8x128xf32>, vector<8x128xf32> -> vector<8x128xf32>
    %31 = vector.extract_strided_slice %7 {offsets = [0, 128], sizes = [8, 128], strides = [1, 1]} : vector<8x512xf32> to vector<8x128xf32>
    %32 = vector.extract_strided_slice %10 {offsets = [0, 128], sizes = [8, 128], strides = [1, 1]} : vector<8x512xf32> to vector<8x128xf32>
    %33 = vector.extract_strided_slice %13 {offsets = [0, 128], sizes = [8, 128], strides = [1, 1]} : vector<8x512xf32> to vector<8x128xf32>
    %cst_18 = arith.constant dense<0.000000e+00> : vector<8x8xf32>
    %34 = tpu.matmul %31, %32, %cst_18 {dimension_numbers = #tpu.dot_dimension_numbers<[1], [1], [0], [0], [0, 0, 1, 0], [], []>} : vector<8x128xf32>, vector<8x128xf32>, vector<8x8xf32> -> vector<8x8xf32>
    %35 = vector.broadcast %1 : f32 to vector<8x8xf32>
    %36 = arith.mulf %34, %35 : vector<8x8xf32>
    %cst_19 = arith.constant dense<0xFF800000> : vector<8xf32>
    %37 = vector.multi_reduction <maximumf>, %36, %cst_19 [1] : vector<8x8xf32> to vector<8xf32>
    %38 = vector.shape_cast %37 : vector<8xf32> to vector<8x1xf32>
    %39 = vector.broadcast %38 : vector<8x1xf32> to vector<8x8xf32>
    %40 = arith.subf %36, %39 : vector<8x8xf32>
    %41 = math.exp %40 : vector<8x8xf32>
    %cst_20 = arith.constant dense<0.000000e+00> : vector<8xf32>
    %42 = vector.multi_reduction <add>, %41, %cst_20 [1] : vector<8x8xf32> to vector<8xf32>
    %43 = vector.shape_cast %42 : vector<8xf32> to vector<8x1xf32>
    %44 = tpu.reciprocal %43 {approx = true} : vector<8x1xf32> -> vector<8x1xf32>
    %45 = vector.broadcast %44 : vector<8x1xf32> to vector<8x8xf32>
    %46 = arith.mulf %41, %45 : vector<8x8xf32>
    %cst_21 = arith.constant dense<0.000000e+00> : vector<8x128xf32>
    %47 = tpu.matmul %46, %33, %cst_21 {dimension_numbers = #tpu.dot_dimension_numbers<[1], [0], [0], [1], [0, 0, 1, 1], [], []>} : vector<8x8xf32>, vector<8x128xf32>, vector<8x128xf32> -> vector<8x128xf32>
    %48 = vector.extract_strided_slice %7 {offsets = [0, 256], sizes = [8, 128], strides = [1, 1]} : vector<8x512xf32> to vector<8x128xf32>
    %49 = vector.extract_strided_slice %10 {offsets = [0, 256], sizes = [8, 128], strides = [1, 1]} : vector<8x512xf32> to vector<8x128xf32>
    %50 = vector.extract_strided_slice %13 {offsets = [0, 256], sizes = [8, 128], strides = [1, 1]} : vector<8x512xf32> to vector<8x128xf32>
    %cst_22 = arith.constant dense<0.000000e+00> : vector<8x8xf32>
    %51 = tpu.matmul %48, %49, %cst_22 {dimension_numbers = #tpu.dot_dimension_numbers<[1], [1], [0], [0], [0, 0, 1, 0], [], []>} : vector<8x128xf32>, vector<8x128xf32>, vector<8x8xf32> -> vector<8x8xf32>
    %52 = vector.broadcast %1 : f32 to vector<8x8xf32>
    %53 = arith.mulf %51, %52 : vector<8x8xf32>
    %cst_23 = arith.constant dense<0xFF800000> : vector<8xf32>
    %54 = vector.multi_reduction <maximumf>, %53, %cst_23 [1] : vector<8x8xf32> to vector<8xf32>
    %55 = vector.shape_cast %54 : vector<8xf32> to vector<8x1xf32>
    %56 = vector.broadcast %55 : vector<8x1xf32> to vector<8x8xf32>
    %57 = arith.subf %53, %56 : vector<8x8xf32>
    %58 = math.exp %57 : vector<8x8xf32>
    %cst_24 = arith.constant dense<0.000000e+00> : vector<8xf32>
    %59 = vector.multi_reduction <add>, %58, %cst_24 [1] : vector<8x8xf32> to vector<8xf32>
    %60 = vector.shape_cast %59 : vector<8xf32> to vector<8x1xf32>
    %61 = tpu.reciprocal %60 {approx = true} : vector<8x1xf32> -> vector<8x1xf32>
    %62 = vector.broadcast %61 : vector<8x1xf32> to vector<8x8xf32>
    %63 = arith.mulf %58, %62 : vector<8x8xf32>
    %cst_25 = arith.constant dense<0.000000e+00> : vector<8x128xf32>
    %64 = tpu.matmul %63, %50, %cst_25 {dimension_numbers = #tpu.dot_dimension_numbers<[1], [0], [0], [1], [0, 0, 1, 1], [], []>} : vector<8x8xf32>, vector<8x128xf32>, vector<8x128xf32> -> vector<8x128xf32>
    %65 = vector.extract_strided_slice %7 {offsets = [0, 384], sizes = [8, 128], strides = [1, 1]} : vector<8x512xf32> to vector<8x128xf32>
    %66 = vector.extract_strided_slice %10 {offsets = [0, 384], sizes = [8, 128], strides = [1, 1]} : vector<8x512xf32> to vector<8x128xf32>
    %67 = vector.extract_strided_slice %13 {offsets = [0, 384], sizes = [8, 128], strides = [1, 1]} : vector<8x512xf32> to vector<8x128xf32>
    %cst_26 = arith.constant dense<0.000000e+00> : vector<8x8xf32>
    %68 = tpu.matmul %65, %66, %cst_26 {dimension_numbers = #tpu.dot_dimension_numbers<[1], [1], [0], [0], [0, 0, 1, 0], [], []>} : vector<8x128xf32>, vector<8x128xf32>, vector<8x8xf32> -> vector<8x8xf32>
    %69 = vector.broadcast %1 : f32 to vector<8x8xf32>
    %70 = arith.mulf %68, %69 : vector<8x8xf32>
    %cst_27 = arith.constant dense<0xFF800000> : vector<8xf32>
    %71 = vector.multi_reduction <maximumf>, %70, %cst_27 [1] : vector<8x8xf32> to vector<8xf32>
    %72 = vector.shape_cast %71 : vector<8xf32> to vector<8x1xf32>
    %73 = vector.broadcast %72 : vector<8x1xf32> to vector<8x8xf32>
    %74 = arith.subf %70, %73 : vector<8x8xf32>
    %75 = math.exp %74 : vector<8x8xf32>
    %cst_28 = arith.constant dense<0.000000e+00> : vector<8xf32>
    %76 = vector.multi_reduction <add>, %75, %cst_28 [1] : vector<8x8xf32> to vector<8xf32>
    %77 = vector.shape_cast %76 : vector<8xf32> to vector<8x1xf32>
    %78 = tpu.reciprocal %77 {approx = true} : vector<8x1xf32> -> vector<8x1xf32>
    %79 = vector.broadcast %78 : vector<8x1xf32> to vector<8x8xf32>
    %80 = arith.mulf %75, %79 : vector<8x8xf32>
    %cst_29 = arith.constant dense<0.000000e+00> : vector<8x128xf32>
    %81 = tpu.matmul %80, %67, %cst_29 {dimension_numbers = #tpu.dot_dimension_numbers<[1], [0], [0], [1], [0, 0, 1, 1], [], []>} : vector<8x8xf32>, vector<8x128xf32>, vector<8x128xf32> -> vector<8x128xf32>
    %82 = tpu.concatenate %30, %47, %64, %81 in 1 : vector<8x128xf32>, vector<8x128xf32>, vector<8x128xf32>, vector<8x128xf32> -> vector<8x512xf32>
    %c0_30 = arith.constant 0 : index
    %c0_31 = arith.constant 0 : index
    %83 = vector.load %arg3[%c0_30, %c0_31] : memref<512x128xf32, #tpu.memory_space<vmem>>, vector<512x128xf32>
    %cst_32 = arith.constant dense<0.000000e+00> : vector<8x128xf32>
    %84 = tpu.matmul %82, %83, %cst_32 {dimension_numbers = #tpu.dot_dimension_numbers<[1], [0], [0], [1], [0, 0, 1, 1], [], []>} : vector<8x512xf32>, vector<512x128xf32>, vector<8x128xf32> -> vector<8x128xf32>
    %c0_33 = arith.constant 0 : index
    %c0_34 = arith.constant 0 : index
    %85 = vector.load %arg4[%c0_33, %c0_34] : memref<8x128xf32, #tpu.memory_space<vmem>>, vector<8x128xf32>
    tpu.vector_store %arg4[%c0_33, %c0_34], %84 {strides = array<i32>} : memref<8x128xf32, #tpu.memory_space<vmem>>, vector<8x128xf32>,
    return
  }
  func.func @transform_0(%arg0: i32) -> (i32, i32, i32) {
    %c0_i32 = arith.constant 0 : i32
    %c0_i32_0 = arith.constant 0 : i32
    %c0_i32_1 = arith.constant 0 : i32
    return %c0_i32, %arg0, %c0_i32_0 : i32, i32, i32
  }
  func.func @transform_1(%arg0: i32) -> (i32, i32) {
    %c0_i32 = arith.constant 0 : i32
    %c0_i32_0 = arith.constant 0 : i32
    %c0_i32_1 = arith.constant 0 : i32
    return %c0_i32, %c0_i32_0 : i32, i32
  }
  func.func @transform_2(%arg0: i32) -> (i32, i32) {
    %c0_i32 = arith.constant 0 : i32
    %c0_i32_0 = arith.constant 0 : i32
    %c0_i32_1 = arith.constant 0 : i32
    return %c0_i32, %c0_i32_0 : i32, i32
  }
  func.func @transform_3(%arg0: i32) -> (i32, i32) {
    %c0_i32 = arith.constant 0 : i32
    %c0_i32_0 = arith.constant 0 : i32
    return %arg0, %c0_i32 : i32, i32
  }
}

</mosaic_0001>

<llo_original>
// kernel: tpu_custom_call.1
$region0: #{tpu_custom_call.1}
  #allocation0 [shape = 'u32[]', space=smem, size = 0x4, offset = 0x4, fixed_abs, tag = 'smem constant byte address 0x4 - core index']
  #allocation1 [shape = 'u32[144,128]{1,0:T(1,128)}', space=vmem, size = 0x12000, scoped, tag = 'internal scratch']
  %s0 = inlined_call_operand.hbm [shape: f32[3,16,32], index: 0, kind: input, shape index: {}]
  %s1 = inlined_call_operand.hbm [shape: f32[32,1536], index: 1, kind: input, shape index: {}]
  %s2 = inlined_call_operand.hbm [shape: f32[512,128], index: 2, kind: input, shape index: {}]
  %s3 = inlined_call_operand.hbm [shape: f32[16,128], index: 3, kind: output, shape index: {}]
  %s4 = sld [smem:[#allocation0]]
  $region57: #{tpu_custom_call.1} parent=0
    _
  %s6 = ssub.s32 1, %s4
  %s7 = scalar_select 0, %s6, %s4
  $region1: #{tpu_custom_call.1} parent=0
    #allocation2 [shape = 'u8[24576]{0}', space=vmem, size = 0x6000, scoped, tag = 'input window, operand 0']
    #allocation3 [shape = 's32[2]{0}', space=sflag, size = 0x8, scoped, tag = 'scoped memory for tpu_custom_call.1']
    #allocation4 [shape = 's32[2]{0}', space=sflag, size = 0x8, scoped, tag = 'scoped memory for tpu_custom_call.1']
    #allocation5 [shape = 'u8[196608]{0}', space=vmem, size = 0x30000, scoped, tag = 'input window, operand 1, single buffered']
    #allocation6 [shape = 's32[1]{0}', space=sflag, size = 0x4, scoped, tag = 'scoped memory for tpu_custom_call.1']
    #allocation7 [shape = 'u8[262144]{0}', space=vmem, size = 0x40000, scoped, tag = 'input window, operand 2, single buffered']
    #allocation8 [shape = 'u8[8192]{0}', space=vmem, size = 0x2000, scoped, tag = 'output window, operand 0']
    %8 = vsyncpa [#allocation3], 0
    %s9 = scalar_lea.sflag [#allocation3], 1
    %10 = vsyncpa %s9, 0
    %11 = vsyncpa [#allocation6], 0
    %12 = vsyncpa [#allocation4], 0
    %s13 = scalar_lea.sflag [#allocation4], 1
    %14 = vsyncpa %s13, 0
    loop: start=0, step=1, limit=4
    $region2: #{tpu_custom_call.1} parent=1 // loop_pre_header
      _
    $region3: #{tpu_custom_call.1} parent=1 // loop_header
      %s16 = sphi 0, %s20
      %p17 = scmp.ge.s32.totalorder %s16, 4
      %s26 = sphi 0, %s28
      %s29 = sphi 0, %s26
      %s30 = sphi 0, %s29
      %s46 = sphi 0, %s30
      %s50 = sphi 0, %s50
      %s52 = sphi 0, %s50
      %s53 = sphi 0, %s52
      %s67 = sphi 0, %s53
      %s71 = sphi 0, %s71
      %s73 = sphi 0, %s71
      %s74 = sphi 0, %s73
      %s88 = sphi 0, %s74
      %s94 = sphi 0, %s96
      %s97 = sphi 0, %s94
      %s98 = sphi 0, %s97
      %s114 = sphi 0, %s98
    $region4: #{tpu_custom_call.1} parent=1 // loop_header_branch
      %19 = sbr.rel (%p17) target = $region8
    $region5: #{tpu_custom_call.1} parent=1 // loop_body
      %s21 = ssub.s32 %s16, 1
      %s22 = ssub.s32 %s16, 2
      %s23 = sadd.s32 %s16, 1
      %s24 = ssub.s32 %s16, %s23
      %p25 = scmp.eq.s32.totalorder %s24, 0
      %s27 = sadd.s32 %s26, 1
      %s28 = scalar_select %p25, %s26, %s27
      %p31 = pneg %p25
      %p32 = scmp.eq.s32.totalorder %s16, 1
      %p33 = por %p31, %p32
      %p34 = scmp.ne.s32.totalorder %s26, %s29
      %p35 = scmp.eq.s32.totalorder %s16, 0
      %p36 = por %p34, %p35
      %p37 = scmp.ne.s32.totalorder %s26, %s29
      %p38 = scmp.eq.s32.totalorder %s21, 1
      %p39 = por %p37, %p38
      %p40 = scmp.ne.s32.totalorder %s29, %s30
      %p41 = scmp.eq.s32.totalorder %s21, 0
      %p42 = por %p40, %p41
      %p43 = scmp.ne.s32.totalorder %s29, %s30
      %p44 = scmp.eq.s32.totalorder %s22, 1
      %p45 = por %p43, %p44
      %p47 = scmp.ne.s32.totalorder %s30, %s46
      %p48 = scmp.eq.s32.totalorder %s22, 0
      %p49 = por %p47, %p48
      %s51 = sadd.s32 %s50, 1
      %p54 = scmp.eq.s32.totalorder %s16, 1
      %p55 = scmp.ne.s32.totalorder %s50, %s52
      %p56 = scmp.eq.s32.totalorder %s16, 0
      %p57 = por %p55, %p56
      %p58 = scmp.ne.s32.totalorder %s50, %s52
      %p59 = scmp.eq.s32.totalorder %s21, 1
      %p60 = por %p58, %p59
      %p61 = scmp.ne.s32.totalorder %s52, %s53
      %p62 = scmp.eq.s32.totalorder %s21, 0
      %p63 = por %p61, %p62
      %p64 = scmp.ne.s32.totalorder %s52, %s53
      %p65 = scmp.eq.s32.totalorder %s22, 1
      %p66 = por %p64, %p65
      %p68 = scmp.ne.s32.totalorder %s53, %s67
      %p69 = scmp.eq.s32.totalorder %s22, 0
      %p70 = por %p68, %p69
      %s72 = sadd.s32 %s71, 1
      %p75 = scmp.eq.s32.totalorder %s16, 1
      %p76 = scmp.ne.s32.totalorder %s71, %s73
      %p77 = scmp.eq.s32.totalorder %s16, 0
      %p78 = por %p76, %p77
      %p79 = scmp.ne.s32.totalorder %s71, %s73
      %p80 = scmp.eq.s32.totalorder %s21, 1
      %p81 = por %p79, %p80
      %p82 = scmp.ne.s32.totalorder %s73, %s74
      %p83 = scmp.eq.s32.totalorder %s21, 0
      %p84 = por %p82, %p83
      %p85 = scmp.ne.s32.totalorder %s73, %s74
      %p86 = scmp.eq.s32.totalorder %s22, 1
      %p87 = por %p85, %p86
      %p89 = scmp.ne.s32.totalorder %s74, %s88
      %p90 = scmp.eq.s32.totalorder %s22, 0
      %p91 = por %p89, %p90
      %s92 = ssub.s32 %s16, %s23
      %p93 = scmp.eq.s32.totalorder %s92, 0
      %s95 = sadd.s32 %s94, 1
      %s96 = scalar_select %p93, %s94, %s95
      %p99 = pneg %p93
      %p100 = scmp.eq.s32.totalorder %s16, 1
      %p101 = por %p99, %p100
      %p102 = scmp.ne.s32.totalorder %s94, %s97
      %p103 = scmp.eq.s32.totalorder %s16, 0
      %p104 = por %p102, %p103
      %p105 = scmp.ne.s32.totalorder %s94, %s97
      %p106 = scmp.eq.s32.totalorder %s21, 1
      %p107 = por %p105, %p106
      %p108 = scmp.ne.s32.totalorder %s97, %s98
      %p109 = scmp.eq.s32.totalorder %s21, 0
      %p110 = por %p108, %p109
      %p111 = scmp.ne.s32.totalorder %s97, %s98
      %p112 = scmp.eq.s32.totalorder %s22, 1
      %p113 = por %p111, %p112
      %p115 = scmp.ne.s32.totalorder %s98, %s114
      %p116 = scmp.eq.s32.totalorder %s22, 0
      %p117 = por %p115, %p116
      %p118 = scmp.le.s32.totalorder 1, %s16
      %p119 = scmp.lt.s32.totalorder %s16, 3
      %p120 = pnand %p118, %p119
      %p121 = pneg %p120
      // Predicated region
      $region9: #{tpu_custom_call.1} parent=5 // pred_check
        _
      $region10: #{tpu_custom_call.1} parent=5 // pred_check_branch
        %123 = sbr.rel (%p120) target = $region12
      $region11: #{tpu_custom_call.1} parent=5 // pred_region
        %s124 = ssub.s32 %s16, 1
        // Predicated region
        $region13: #{tpu_custom_call.1} parent=11 // pred_check
          %p125 = pneg %p63
        $region14: #{tpu_custom_call.1} parent=11 // pred_check_branch
          %127 = sbr.rel (%p125) target = $region16
        $region15: #{tpu_custom_call.1} parent=11 // pred_region
          %s129 = ssub.s32 6144, 6144
          %130 = vsyncadd [#allocation6], %s129
          %s131 = sshll.u32 [#allocation5], 4
          %s132 = int_to_ptr.vmem [resolvable:$true] %s131
          %137 = dma.hbm_to_vmem [thread:$0]  %s1, 6144, %s132, [#allocation6], 1536, 1536, 96
        $region16: #{tpu_custom_call.1} parent=11 // pred_fallthru
          _
        // Predicated region
        $region17: #{tpu_custom_call.1} parent=11 // pred_check
          %p138 = pneg %p84
        $region18: #{tpu_custom_call.1} parent=11 // pred_check_branch
          %140 = sbr.rel (%p138) target = $region20
        $region19: #{tpu_custom_call.1} parent=11 // pred_region
          %s142 = ssub.s32 8192, 8192
          %143 = vsyncadd [#allocation6], %s142
          %s144 = sshll.u32 [#allocation7], 4
          %s145 = int_to_ptr.vmem [resolvable:$true] %s144
          %150 = dma.hbm_to_vmem [thread:$0]  %s2, 8192, %s145, [#allocation6], 128, 128, 8
        $region20: #{tpu_custom_call.1} parent=11 // pred_fallthru
          _
      $region12: #{tpu_custom_call.1} parent=5 // pred_fallthru
        _
      %p151 = scmp.lt.s32.totalorder %s16, 2
      // Predicated region
      $region21: #{tpu_custom_call.1} parent=5 // pred_check
        %p152 = pneg %p151
      $region22: #{tpu_custom_call.1} parent=5 // pred_check_branch
        %154 = sbr.rel (%p152) target = $region24
      $region23: #{tpu_custom_call.1} parent=5 // pred_region
        // Predicated region
        $region25: #{tpu_custom_call.1} parent=23 // pred_check
          %p155 = pneg %p36
        $region26: #{tpu_custom_call.1} parent=23 // pred_check_branch
          %157 = sbr.rel (%p155) target = $region28
        $region27: #{tpu_custom_call.1} parent=23 // pred_region
          %s158 = sand.u32 %s26, 1
          %s159 = scalar_lea.sflag [#allocation3], %s158
          %s160 = sand.u32 %s26, 1
          %s161 = smul.addr %s160, 24
          %s162 = scalar_lea.vmem [#allocation2], %s161
          %s164 = ssub.s32 384, 384
          %165 = vsyncadd %s159, %s164
          %s166 = smul.addr %s16, 128
          %s167 = scalar_lea.hbm %s0, %s166
          %s168 = sshll.u32 %s162, 4
          %s169 = int_to_ptr.vmem [resolvable:$true] %s168
          %174 = dma.hbm_to_vmem [thread:$0]  %s167, 384, %s169, %s159, 256, 128, 8
        $region28: #{tpu_custom_call.1} parent=23 // pred_fallthru
          _
      $region24: #{tpu_custom_call.1} parent=5 // pred_fallthru
        _
      %p175 = scmp.le.s32.totalorder 1, %s16
      %p176 = scmp.lt.s32.totalorder %s16, 3
      %p177 = pnand %p175, %p176
      %p178 = pneg %p177
      // Predicated region
      $region29: #{tpu_custom_call.1} parent=5 // pred_check
        _
      $region30: #{tpu_custom_call.1} parent=5 // pred_check_branch
        %180 = sbr.rel (%p177) target = $region32
      $region31: #{tpu_custom_call.1} parent=5 // pred_region
        %s181 = ssub.s32 %s16, 1
        %s182 = sand.u32 %s29, 1
        %s183 = scalar_lea.sflag [#allocation3], %s182
        %s184 = sand.u32 %s29, 1
        %s185 = smul.addr %s184, 24
        %s186 = scalar_lea.vmem [#allocation2], %s185
        // Predicated region
        $region33: #{tpu_custom_call.1} parent=31 // pred_check
          %p187 = pneg %p42
        $region34: #{tpu_custom_call.1} parent=31 // pred_check_branch
          %189 = sbr.rel (%p187) target = $region36
        $region35: #{tpu_custom_call.1} parent=31 // pred_region
          %190 = dma.done %s183, 384
        $region36: #{tpu_custom_call.1} parent=31 // pred_fallthru
          _
        // Predicated region
        $region37: #{tpu_custom_call.1} parent=31 // pred_check
          %p191 = pneg %p63
        $region38: #{tpu_custom_call.1} parent=31 // pred_check_branch
          %193 = sbr.rel (%p191) target = $region40
        $region39: #{tpu_custom_call.1} parent=31 // pred_region
          %194 = dma.done [#allocation6], 6144
        $region40: #{tpu_custom_call.1} parent=31 // pred_fallthru
          _
        // Predicated region
        $region41: #{tpu_custom_call.1} parent=31 // pred_check
          %p195 = pneg %p84
        $region42: #{tpu_custom_call.1} parent=31 // pred_check_branch
          %197 = sbr.rel (%p195) target = $region44
        $region43: #{tpu_custom_call.1} parent=31 // pred_region
          %198 = dma.done [#allocation6], 8192
        $region44: #{tpu_custom_call.1} parent=31 // pred_fallthru
          _
        %s199 = sand.u32 %s29, 1
        %s200 = scalar_lea.sflag [#allocation3], %s199
        %s201 = sand.u32 %s29, 1
        %s202 = smul.addr %s201, 24
        %s203 = scalar_lea.vmem [#allocation2], %s202
        %p204 = pneg %p42
        %p205 = pneg %p39
        %p206 = pneg %p63
        %p207 = pneg %p60
        %p208 = pneg %p84
        %p209 = pneg %p81
        %p210 = pneg %p110
        %p211 = pneg %p107
        %s212 = sand.u32 %s97, 1
        %s213 = scalar_lea.sflag [#allocation4], %s212
        %s214 = sand.u32 %s97, 1
        %s215 = smul.addr %s214, 8
        %s216 = scalar_lea.vmem [#allocation8], %s215
        %v217 = vld [vmem:[#allocation5] sm:$0xff]
        %v218 = vld [vmem:[#allocation5 + $0x8] sm:$0xff]
        %v219 = vld [vmem:[#allocation5 + $0x10] sm:$0xff]
        %v220 = vld [vmem:[#allocation5 + $0x18] sm:$0xff]
        %v221 = vld [vmem:[#allocation5 + $0x60] sm:$0xff]
        %v222 = vld [vmem:[#allocation5 + $0x68] sm:$0xff]
        %v223 = vld [vmem:[#allocation5 + $0x70] sm:$0xff]
        %v224 = vld [vmem:[#allocation5 + $0x78] sm:$0xff]
        %v225 = vld [vmem:[#allocation5 + $0xc0] sm:$0xff]
        %v226 = vld [vmem:[#allocation5 + $0xc8] sm:$0xff]
        %v227 = vld [vmem:[#allocation5 + $0xd0] sm:$0xff]
        %v228 = vld [vmem:[#allocation5 + $0xd8] sm:$0xff]
        %v229 = vld [vmem:[#allocation5 + $0x120] sm:$0xff]
        %v230 = vld [vmem:[#allocation5 + $0x128] sm:$0xff]
        %v231 = vld [vmem:[#allocation5 + $0x130] sm:$0xff]
        %v232 = vld [vmem:[#allocation5 + $0x138] sm:$0xff]
        %v233 = vld [vmem:[#allocation5 + $0x20] sm:$0xff]
        %v234 = vld [vmem:[#allocation5 + $0x28] sm:$0xff]
        %v235 = vld [vmem:[#allocation5 + $0x30] sm:$0xff]
        %v236 = vld [vmem:[#allocation5 + $0x38] sm:$0xff]
        %v237 = vld [vmem:[#allocation5 + $0x80] sm:$0xff]
        %v238 = vld [vmem:[#allocation5 + $0x88] sm:$0xff]
        %v239 = vld [vmem:[#allocation5 + $0x90] sm:$0xff]
        %v240 = vld [vmem:[#allocation5 + $0x98] sm:$0xff]
        %v241 = vld [vmem:[#allocation5 + $0xe0] sm:$0xff]
        %v242 = vld [vmem:[#allocation5 + $0xe8] sm:$0xff]
        %v243 = vld [vmem:[#allocation5 + $0xf0] sm:$0xff]
        %v244 = vld [vmem:[#allocation5 + $0xf8] sm:$0xff]
        %v245 = vld [vmem:[#allocation5 + $0x140] sm:$0xff]
        %v246 = vld [vmem:[#allocation5 + $0x148] sm:$0xff]
        %v247 = vld [vmem:[#allocation5 + $0x150] sm:$0xff]
        %v248 = vld [vmem:[#allocation5 + $0x158] sm:$0xff]
        %v249 = vld [vmem:[#allocation5 + $0x40] sm:$0xff]
        %v250 = vld [vmem:[#allocation5 + $0x48] sm:$0xff]
        %v251 = vld [vmem:[#allocation5 + $0x50] sm:$0xff]
        %v252 = vld [vmem:[#allocation5 + $0x58] sm:$0xff]
        %v253 = vld [vmem:[#allocation5 + $0xa0] sm:$0xff]
        %v254 = vld [vmem:[#allocation5 + $0xa8] sm:$0xff]
        %v255 = vld [vmem:[#allocation5 + $0xb0] sm:$0xff]
        %v256 = vld [vmem:[#allocation5 + $0xb8] sm:$0xff]
        %v257 = vld [vmem:[#allocation5 + $0x100] sm:$0xff]
        %v258 = vld [vmem:[#allocation5 + $0x108] sm:$0xff]
        %v259 = vld [vmem:[#allocation5 + $0x110] sm:$0xff]
        %v260 = vld [vmem:[#allocation5 + $0x118] sm:$0xff]
        %v261 = vld [vmem:[#allocation5 + $0x160] sm:$0xff]
        %v262 = vld [vmem:[#allocation5 + $0x168] sm:$0xff]
        %v263 = vld [vmem:[#allocation5 + $0x170] sm:$0xff]
        %v264 = vld [vmem:[#allocation5 + $0x178] sm:$0xff]
        %v265 = vld [vmem:[%s186] sm:$0xff]
        %vm266 = vcmask 261120
        %v268 = vsel %vm266, %v265, 0
        %270 = vmatprep.subr.mxu0 0.0
        %271 = vmatpush1.msra.mxu0 0.0
        %272 = vmatprep.subr.mxu0 0.0
        %273 = vmatpush1.msra.mxu0 0.0
        %274 = vmatprep.subr.mxu0 0.0
        %275 = vmatpush1.msra.mxu0 0.0
        %276 = vmatprep.subr.mxu0 0.0
        %277 = vmatpush1.msra.mxu0 0.0
        %278 = vmatprep.subr.mxu0 0.0
        %279 = vmatpush1.msra.mxu0 0.0
        %280 = vmatprep.subr.mxu0 0.0
        %281 = vmatpush1.msra.mxu0 0.0
        %282 = vmatprep.subr.mxu0 0.0
        %283 = vmatpush1.msra.mxu0 0.0
        %284 = vmatprep.subr.mxu0 0.0
        %285 = vmatpush1.msra.mxu0 0.0
        %286 = vmatprep.subr.mxu0 0.0
        %287 = vmatpush1.msra.mxu0 0.0
        %288 = vmatprep.subr.mxu0 0.0
        %289 = vmatpush1.msra.mxu0 0.0
        %290 = vmatprep.subr.mxu0 0.0
        %291 = vmatpush1.msra.mxu0 0.0
        %292 = vmatprep.subr.mxu0 0.0
        %293 = vmatpush1.msra.mxu0 0.0
        %294 = vmatprep.subr.mxu0 %v230
        %295 = vmatpush1.msra.mxu0 %v229
        %296 = vmatprep.subr.mxu0 %v226
        %297 = vmatpush1.msra.mxu0 %v225
        %298 = vmatprep.subr.mxu0 %v222
        %299 = vmatpush1.msra.mxu0 %v221
        %300 = vmatprep.subr.mxu0 %v218
        %301 = vmatpush1.msra.mxu0 %v217
        %302 = vmatprep.subr.mxu0 0.0
        %303 = vmatpush2.msra.mxu0 0.0
        %304 = vmatprep.subr.mxu0 0.0
        %305 = vmatpush2.msra.mxu0 0.0
        %306 = vmatprep.subr.mxu0 0.0
        %307 = vmatpush2.msra.mxu0 0.0
        %308 = vmatprep.subr.mxu0 0.0
        %309 = vmatpush2.msra.mxu0 0.0
        %310 = vmatprep.subr.mxu0 0.0
        %311 = vmatpush2.msra.mxu0 0.0
        %312 = vmatprep.subr.mxu0 0.0
        %313 = vmatpush2.msra.mxu0 0.0
        %314 = vmatprep.subr.mxu0 0.0
        %315 = vmatpush2.msra.mxu0 0.0
        %316 = vmatprep.subr.mxu0 0.0
        %317 = vmatpush2.msra.mxu0 0.0
        %318 = vmatprep.subr.mxu0 0.0
        %319 = vmatpush2.msra.mxu0 0.0
        %320 = vmatprep.subr.mxu0 0.0
        %321 = vmatpush2.msra.mxu0 0.0
        %322 = vmatprep.subr.mxu0 0.0
        %323 = vmatpush2.msra.mxu0 0.0
        %324 = vmatprep.subr.mxu0 0.0
        %325 = vmatpush2.msra.mxu0 0.0
        %326 = vmatprep.subr.mxu0 0.0
        %327 = vmatpush2.msra.mxu0 0.0
        %328 = vmatprep.subr.mxu0 0.0
        %329 = vmatpush2.msra.mxu0 0.0
        %330 = vmatprep.subr.mxu0 0.0
        %331 = vmatpush2.msra.mxu0 0.0
        %332 = vmatprep.subr.mxu0 0.0
        %333 = vmatpush2.msra.mxu0 0.0
        %334 = vmatprep.mubr.f32.mxu0 0.0
        %335 = vmatmul.mubr.f32.gmra.mxu0 %v268
        %v336 = vpop.f32.mrf.mxu0
        %v337 = vadd.f32 0.0, %v336
        %v338 = vpop.f32.mrf.mxu0
        %v339 = vadd.f32 0.0, %v338
        %340 = vdwg.mxu0
        %341 = vmatprep.subr.mxu0 0.0
        %342 = vmatpush1.msra.mxu0 0.0
        %343 = vmatprep.subr.mxu0 0.0
        %344 = vmatpush1.msra.mxu0 0.0
        %345 = vmatprep.subr.mxu0 0.0
        %346 = vmatpush1.msra.mxu0 0.0
        %347 = vmatprep.subr.mxu0 0.0
        %348 = vmatpush1.msra.mxu0 0.0
        %349 = vmatprep.subr.mxu0 0.0
        %350 = vmatpush1.msra.mxu0 0.0
        %351 = vmatprep.subr.mxu0 0.0
        %352 = vmatpush1.msra.mxu0 0.0
        %353 = vmatprep.subr.mxu0 0.0
        %354 = vmatpush1.msra.mxu0 0.0
        %355 = vmatprep.subr.mxu0 0.0
        %356 = vmatpush1.msra.mxu0 0.0
        %357 = vmatprep.subr.mxu0 0.0
        %358 = vmatpush1.msra.mxu0 0.0
        %359 = vmatprep.subr.mxu0 0.0
        %360 = vmatpush1.msra.mxu0 0.0
        %361 = vmatprep.subr.mxu0 0.0
        %362 = vmatpush1.msra.mxu0 0.0
        %363 = vmatprep.subr.mxu0 0.0
        %364 = vmatpush1.msra.mxu0 0.0
        %365 = vmatprep.subr.mxu0 %v232
        %366 = vmatpush1.msra.mxu0 %v231
        %367 = vmatprep.subr.mxu0 %v228
        %368 = vmatpush1.msra.mxu0 %v227
        %369 = vmatprep.subr.mxu0 %v224
        %370 = vmatpush1.msra.mxu0 %v223
        %371 = vmatprep.subr.mxu0 %v220
        %372 = vmatpush1.msra.mxu0 %v219
        %373 = vmatprep.subr.mxu0 0.0
        %374 = vmatpush2.msra.mxu0 0.0
        %375 = vmatprep.subr.mxu0 0.0
        %376 = vmatpush2.msra.mxu0 0.0
        %377 = vmatprep.subr.mxu0 0.0
        %378 = vmatpush2.msra.mxu0 0.0
        %379 = vmatprep.subr.mxu0 0.0
        %380 = vmatpush2.msra.mxu0 0.0
        %381 = vmatprep.subr.mxu0 0.0
        %382 = vmatpush2.msra.mxu0 0.0
        %383 = vmatprep.subr.mxu0 0.0
        %384 = vmatpush2.msra.mxu0 0.0
        %385 = vmatprep.subr.mxu0 0.0
        %386 = vmatpush2.msra.mxu0 0.0
        %387 = vmatprep.subr.mxu0 0.0
        %388 = vmatpush2.msra.mxu0 0.0
        %389 = vmatprep.subr.mxu0 0.0
        %390 = vmatpush2.msra.mxu0 0.0
        %391 = vmatprep.subr.mxu0 0.0
        %392 = vmatpush2.msra.mxu0 0.0
        %393 = vmatprep.subr.mxu0 0.0
        %394 = vmatpush2.msra.mxu0 0.0
        %395 = vmatprep.subr.mxu0 0.0
        %396 = vmatpush2.msra.mxu0 0.0
        %397 = vmatprep.subr.mxu0 0.0
        %398 = vmatpush2.msra.mxu0 0.0
        %399 = vmatprep.subr.mxu0 0.0
        %400 = vmatpush2.msra.mxu0 0.0
        %401 = vmatprep.subr.mxu0 0.0
        %402 = vmatpush2.msra.mxu0 0.0
        %403 = vmatprep.subr.mxu0 0.0
        %404 = vmatpush2.msra.mxu0 0.0
        %405 = vmatprep.mubr.f32.mxu0 0.0
        %406 = vmatmul.mubr.f32.gmra.mxu0 %v268
        %v407 = vpop.f32.mrf.mxu0
        %v408 = vadd.f32 0.0, %v407
        %v409 = vpop.f32.mrf.mxu0
        %v410 = vadd.f32 0.0, %v409
        %411 = vdwg.mxu0
        %s412 = scalar_lea.vmem %s186, 8 [#allocation2]
        %v413 = vld [vmem:[%s412] sm:$0xff]
        %v415 = vsel %vm266, %v413, 0
        %417 = vmatprep.subr.mxu0 0.0
        %418 = vmatpush1.msra.mxu0 0.0
        %419 = vmatprep.subr.mxu0 0.0
        %420 = vmatpush1.msra.mxu0 0.0
        %421 = vmatprep.subr.mxu0 0.0
        %422 = vmatpush1.msra.mxu0 0.0
        %423 = vmatprep.subr.mxu0 0.0
        %424 = vmatpush1.msra.mxu0 0.0
        %425 = vmatprep.subr.mxu0 0.0
        %426 = vmatpush1.msra.mxu0 0.0
        %427 = vmatprep.subr.mxu0 0.0
        %428 = vmatpush1.msra.mxu0 0.0
        %429 = vmatprep.subr.mxu0 0.0
        %430 = vmatpush1.msra.mxu0 0.0
        %431 = vmatprep.subr.mxu0 0.0
        %432 = vmatpush1.msra.mxu0 0.0
        %433 = vmatprep.subr.mxu0 0.0
        %434 = vmatpush1.msra.mxu0 0.0
        %435 = vmatprep.subr.mxu0 0.0
        %436 = vmatpush1.msra.mxu0 0.0
        %437 = vmatprep.subr.mxu0 0.0
        %438 = vmatpush1.msra.mxu0 0.0
        %439 = vmatprep.subr.mxu0 0.0
        %440 = vmatpush1.msra.mxu0 0.0
        %441 = vmatprep.subr.mxu0 %v246
        %442 = vmatpush1.msra.mxu0 %v245
        %443 = vmatprep.subr.mxu0 %v242
        %444 = vmatpush1.msra.mxu0 %v241
        %445 = vmatprep.subr.mxu0 %v238
        %446 = vmatpush1.msra.mxu0 %v237
        %447 = vmatprep.subr.mxu0 %v234
        %448 = vmatpush1.msra.mxu0 %v233
        %449 = vmatprep.subr.mxu0 0.0
        %450 = vmatpush2.msra.mxu0 0.0
        %451 = vmatprep.subr.mxu0 0.0
        %452 = vmatpush2.msra.mxu0 0.0
        %453 = vmatprep.subr.mxu0 0.0
        %454 = vmatpush2.msra.mxu0 0.0
        %455 = vmatprep.subr.mxu0 0.0
        %456 = vmatpush2.msra.mxu0 0.0
        %457 = vmatprep.subr.mxu0 0.0
        %458 = vmatpush2.msra.mxu0 0.0
        %459 = vmatprep.subr.mxu0 0.0
        %460 = vmatpush2.msra.mxu0 0.0
        %461 = vmatprep.subr.mxu0 0.0
        %462 = vmatpush2.msra.mxu0 0.0
        %463 = vmatprep.subr.mxu0 0.0
        %464 = vmatpush2.msra.mxu0 0.0
        %465 = vmatprep.subr.mxu0 0.0
        %466 = vmatpush2.msra.mxu0 0.0
        %467 = vmatprep.subr.mxu0 0.0
        %468 = vmatpush2.msra.mxu0 0.0
        %469 = vmatprep.subr.mxu0 0.0
        %470 = vmatpush2.msra.mxu0 0.0
        %471 = vmatprep.subr.mxu0 0.0
        %472 = vmatpush2.msra.mxu0 0.0
        %473 = vmatprep.subr.mxu0 0.0
        %474 = vmatpush2.msra.mxu0 0.0
        %475 = vmatprep.subr.mxu0 0.0
        %476 = vmatpush2.msra.mxu0 0.0
        %477 = vmatprep.subr.mxu0 0.0
        %478 = vmatpush2.msra.mxu0 0.0
        %479 = vmatprep.subr.mxu0 0.0
        %480 = vmatpush2.msra.mxu0 0.0
        %481 = vmatprep.mubr.f32.mxu0 0.0
        %482 = vmatmul.mubr.f32.gmra.mxu0 %v415
        %v483 = vpop.f32.mrf.mxu0
        %v484 = vadd.f32 0.0, %v483
        %v485 = vpop.f32.mrf.mxu0
        %v486 = vadd.f32 0.0, %v485
        %487 = vdwg.mxu0
        %488 = vmatprep.subr.mxu0 0.0
        %489 = vmatpush1.msra.mxu0 0.0
        %490 = vmatprep.subr.mxu0 0.0
        %491 = vmatpush1.msra.mxu0 0.0
        %492 = vmatprep.subr.mxu0 0.0
        %493 = vmatpush1.msra.mxu0 0.0
        %494 = vmatprep.subr.mxu0 0.0
        %495 = vmatpush1.msra.mxu0 0.0
        %496 = vmatprep.subr.mxu0 0.0
        %497 = vmatpush1.msra.mxu0 0.0
        %498 = vmatprep.subr.mxu0 0.0
        %499 = vmatpush1.msra.mxu0 0.0
        %500 = vmatprep.subr.mxu0 0.0
        %501 = vmatpush1.msra.mxu0 0.0
        %502 = vmatprep.subr.mxu0 0.0
        %503 = vmatpush1.msra.mxu0 0.0
        %504 = vmatprep.subr.mxu0 0.0
        %505 = vmatpush1.msra.mxu0 0.0
        %506 = vmatprep.subr.mxu0 0.0
        %507 = vmatpush1.msra.mxu0 0.0
        %508 = vmatprep.subr.mxu0 0.0
        %509 = vmatpush1.msra.mxu0 0.0
        %510 = vmatprep.subr.mxu0 0.0
        %511 = vmatpush1.msra.mxu0 0.0
        %512 = vmatprep.subr.mxu0 %v248
        %513 = vmatpush1.msra.mxu0 %v247
        %514 = vmatprep.subr.mxu0 %v244
        %515 = vmatpush1.msra.mxu0 %v243
        %516 = vmatprep.subr.mxu0 %v240
        %517 = vmatpush1.msra.mxu0 %v239
        %518 = vmatprep.subr.mxu0 %v236
        %519 = vmatpush1.msra.mxu0 %v235
        %520 = vmatprep.subr.mxu0 0.0
        %521 = vmatpush2.msra.mxu0 0.0
        %522 = vmatprep.subr.mxu0 0.0
        %523 = vmatpush2.msra.mxu0 0.0
        %524 = vmatprep.subr.mxu0 0.0
        %525 = vmatpush2.msra.mxu0 0.0
        %526 = vmatprep.subr.mxu0 0.0
        %527 = vmatpush2.msra.mxu0 0.0
        %528 = vmatprep.subr.mxu0 0.0
        %529 = vmatpush2.msra.mxu0 0.0
        %530 = vmatprep.subr.mxu0 0.0
        %531 = vmatpush2.msra.mxu0 0.0
        %532 = vmatprep.subr.mxu0 0.0
        %533 = vmatpush2.msra.mxu0 0.0
        %534 = vmatprep.subr.mxu0 0.0
        %535 = vmatpush2.msra.mxu0 0.0
        %536 = vmatprep.subr.mxu0 0.0
        %537 = vmatpush2.msra.mxu0 0.0
        %538 = vmatprep.subr.mxu0 0.0
        %539 = vmatpush2.msra.mxu0 0.0
        %540 = vmatprep.subr.mxu0 0.0
        %541 = vmatpush2.msra.mxu0 0.0
        %542 = vmatprep.subr.mxu0 0.0
        %543 = vmatpush2.msra.mxu0 0.0
        %544 = vmatprep.subr.mxu0 0.0
        %545 = vmatpush2.msra.mxu0 0.0
        %546 = vmatprep.subr.mxu0 0.0
        %547 = vmatpush2.msra.mxu0 0.0
        %548 = vmatprep.subr.mxu0 0.0
        %549 = vmatpush2.msra.mxu0 0.0
        %550 = vmatprep.subr.mxu0 0.0
        %551 = vmatpush2.msra.mxu0 0.0
        %552 = vmatprep.mubr.f32.mxu0 0.0
        %553 = vmatmul.mubr.f32.gmra.mxu0 %v415
        %v554 = vpop.f32.mrf.mxu0
        %v555 = vadd.f32 0.0, %v554
        %v556 = vpop.f32.mrf.mxu0
        %v557 = vadd.f32 0.0, %v556
        %558 = vdwg.mxu0
        %s559 = scalar_lea.vmem %s186, 16 [#allocation2]
        %v560 = vld [vmem:[%s559] sm:$0xff]
        %v562 = vsel %vm266, %v560, 0
        %564 = vmatprep.subr.mxu0 0.0
        %565 = vmatpush1.msra.mxu0 0.0
        %566 = vmatprep.subr.mxu0 0.0
        %567 = vmatpush1.msra.mxu0 0.0
        %568 = vmatprep.subr.mxu0 0.0
        %569 = vmatpush1.msra.mxu0 0.0
        %570 = vmatprep.subr.mxu0 0.0
        %571 = vmatpush1.msra.mxu0 0.0
        %572 = vmatprep.subr.mxu0 0.0
        %573 = vmatpush1.msra.mxu0 0.0
        %574 = vmatprep.subr.mxu0 0.0
        %575 = vmatpush1.msra.mxu0 0.0
        %576 = vmatprep.subr.mxu0 0.0
        %577 = vmatpush1.msra.mxu0 0.0
        %578 = vmatprep.subr.mxu0 0.0
        %579 = vmatpush1.msra.mxu0 0.0
        %580 = vmatprep.subr.mxu0 0.0
        %581 = vmatpush1.msra.mxu0 0.0
        %582 = vmatprep.subr.mxu0 0.0
        %583 = vmatpush1.msra.mxu0 0.0
        %584 = vmatprep.subr.mxu0 0.0
        %585 = vmatpush1.msra.mxu0 0.0
        %586 = vmatprep.subr.mxu0 0.0
        %587 = vmatpush1.msra.mxu0 0.0
        %588 = vmatprep.subr.mxu0 %v262
        %589 = vmatpush1.msra.mxu0 %v261
        %590 = vmatprep.subr.mxu0 %v258
        %591 = vmatpush1.msra.mxu0 %v257
        %592 = vmatprep.subr.mxu0 %v254
        %593 = vmatpush1.msra.mxu0 %v253
        %594 = vmatprep.subr.mxu0 %v250
        %595 = vmatpush1.msra.mxu0 %v249
        %596 = vmatprep.subr.mxu0 0.0
        %597 = vmatpush2.msra.mxu0 0.0
        %598 = vmatprep.subr.mxu0 0.0
        %599 = vmatpush2.msra.mxu0 0.0
        %600 = vmatprep.subr.mxu0 0.0
        %601 = vmatpush2.msra.mxu0 0.0
        %602 = vmatprep.subr.mxu0 0.0
        %603 = vmatpush2.msra.mxu0 0.0
        %604 = vmatprep.subr.mxu0 0.0
        %605 = vmatpush2.msra.mxu0 0.0
        %606 = vmatprep.subr.mxu0 0.0
        %607 = vmatpush2.msra.mxu0 0.0
        %608 = vmatprep.subr.mxu0 0.0
        %609 = vmatpush2.msra.mxu0 0.0
        %610 = vmatprep.subr.mxu0 0.0
        %611 = vmatpush2.msra.mxu0 0.0
        %612 = vmatprep.subr.mxu0 0.0
        %613 = vmatpush2.msra.mxu0 0.0
        %614 = vmatprep.subr.mxu0 0.0
        %615 = vmatpush2.msra.mxu0 0.0
        %616 = vmatprep.subr.mxu0 0.0
        %617 = vmatpush2.msra.mxu0 0.0
        %618 = vmatprep.subr.mxu0 0.0
        %619 = vmatpush2.msra.mxu0 0.0
        %620 = vmatprep.subr.mxu0 0.0
        %621 = vmatpush2.msra.mxu0 0.0
        %622 = vmatprep.subr.mxu0 0.0
        %623 = vmatpush2.msra.mxu0 0.0
        %624 = vmatprep.subr.mxu0 0.0
        %625 = vmatpush2.msra.mxu0 0.0
        %626 = vmatprep.subr.mxu0 0.0
        %627 = vmatpush2.msra.mxu0 0.0
        %628 = vmatprep.mubr.f32.mxu0 0.0
        %629 = vmatmul.mubr.f32.gmra.mxu0 %v562
        %v630 = vpop.f32.mrf.mxu0
        %v631 = vadd.f32 0.0, %v630
        %v632 = vpop.f32.mrf.mxu0
        %v633 = vadd.f32 0.0, %v632
        %634 = vdwg.mxu0
        %635 = vmatprep.subr.mxu0 0.0
        %636 = vmatpush1.msra.mxu0 0.0
        %637 = vmatprep.subr.mxu0 0.0
        %638 = vmatpush1.msra.mxu0 0.0
        %639 = vmatprep.subr.mxu0 0.0
        %640 = vmatpush1.msra.mxu0 0.0
        %641 = vmatprep.subr.mxu0 0.0
        %642 = vmatpush1.msra.mxu0 0.0
        %643 = vmatprep.subr.mxu0 0.0
        %644 = vmatpush1.msra.mxu0 0.0
        %645 = vmatprep.subr.mxu0 0.0
        %646 = vmatpush1.msra.mxu0 0.0
        %647 = vmatprep.subr.mxu0 0.0
        %648 = vmatpush1.msra.mxu0 0.0
        %649 = vmatprep.subr.mxu0 0.0
        %650 = vmatpush1.msra.mxu0 0.0
        %651 = vmatprep.subr.mxu0 0.0
        %652 = vmatpush1.msra.mxu0 0.0
        %653 = vmatprep.subr.mxu0 0.0
        %654 = vmatpush1.msra.mxu0 0.0
        %655 = vmatprep.subr.mxu0 0.0
        %656 = vmatpush1.msra.mxu0 0.0
        %657 = vmatprep.subr.mxu0 0.0
        %658 = vmatpush1.msra.mxu0 0.0
        %659 = vmatprep.subr.mxu0 %v264
        %660 = vmatpush1.msra.mxu0 %v263
        %661 = vmatprep.subr.mxu0 %v260
        %662 = vmatpush1.msra.mxu0 %v259
        %663 = vmatprep.subr.mxu0 %v256
        %664 = vmatpush1.msra.mxu0 %v255
        %665 = vmatprep.subr.mxu0 %v252
        %666 = vmatpush1.msra.mxu0 %v251
        %667 = vmatprep.subr.mxu0 0.0
        %668 = vmatpush2.msra.mxu0 0.0
        %669 = vmatprep.subr.mxu0 0.0
        %670 = vmatpush2.msra.mxu0 0.0
        %671 = vmatprep.subr.mxu0 0.0
        %672 = vmatpush2.msra.mxu0 0.0
        %673 = vmatprep.subr.mxu0 0.0
        %674 = vmatpush2.msra.mxu0 0.0
        %675 = vmatprep.subr.mxu0 0.0
        %676 = vmatpush2.msra.mxu0 0.0
        %677 = vmatprep.subr.mxu0 0.0
        %678 = vmatpush2.msra.mxu0 0.0
        %679 = vmatprep.subr.mxu0 0.0
        %680 = vmatpush2.msra.mxu0 0.0
        %681 = vmatprep.subr.mxu0 0.0
        %682 = vmatpush2.msra.mxu0 0.0
        %683 = vmatprep.subr.mxu0 0.0
        %684 = vmatpush2.msra.mxu0 0.0
        %685 = vmatprep.subr.mxu0 0.0
        %686 = vmatpush2.msra.mxu0 0.0
        %687 = vmatprep.subr.mxu0 0.0
        %688 = vmatpush2.msra.mxu0 0.0
        %689 = vmatprep.subr.mxu0 0.0
        %690 = vmatpush2.msra.mxu0 0.0
        %691 = vmatprep.subr.mxu0 0.0
        %692 = vmatpush2.msra.mxu0 0.0
        %693 = vmatprep.subr.mxu0 0.0
        %694 = vmatpush2.msra.mxu0 0.0
        %695 = vmatprep.subr.mxu0 0.0
        %696 = vmatpush2.msra.mxu0 0.0
        %697 = vmatprep.subr.mxu0 0.0
        %698 = vmatpush2.msra.mxu0 0.0
        %699 = vmatprep.mubr.f32.mxu0 0.0
        %700 = vmatmul.mubr.f32.gmra.mxu0 %v562
        %v701 = vpop.f32.mrf.mxu0
        %v702 = vadd.f32 0.0, %v701
        %v703 = vpop.f32.mrf.mxu0
        %v704 = vadd.f32 0.0, %v703
        %705 = vdwg.mxu0
        %706 = vmatprep.subr.mxu0 0.0
        %707 = vmatpush1.xpose.msra.mxu0 0.0
        %708 = vmatprep.subr.mxu0 0.0
        %709 = vmatpush1.xpose.msra.mxu0 0.0
        %710 = vmatprep.subr.mxu0 0.0
        %711 = vmatpush1.xpose.msra.mxu0 0.0
        %712 = vmatprep.subr.mxu0 0.0
        %713 = vmatpush1.xpose.msra.mxu0 0.0
        %714 = vmatprep.subr.mxu0 0.0
        %715 = vmatpush1.xpose.msra.mxu0 0.0
        %716 = vmatprep.subr.mxu0 0.0
        %717 = vmatpush1.xpose.msra.mxu0 0.0
        %718 = vmatprep.subr.mxu0 0.0
        %719 = vmatpush1.xpose.msra.mxu0 0.0
        %720 = vmatprep.subr.mxu0 0.0
        %721 = vmatpush1.xpose.msra.mxu0 0.0
        %722 = vmatprep.subr.mxu0 0.0
        %723 = vmatpush1.xpose.msra.mxu0 0.0
        %724 = vmatprep.subr.mxu0 0.0
        %725 = vmatpush1.xpose.msra.mxu0 0.0
        %726 = vmatprep.subr.mxu0 0.0
        %727 = vmatpush1.xpose.msra.mxu0 0.0
        %728 = vmatprep.subr.mxu0 0.0
        %729 = vmatpush1.xpose.msra.mxu0 0.0
        %730 = vmatprep.subr.mxu0 0.0
        %731 = vmatpush1.xpose.msra.mxu0 0.0
        %732 = vmatprep.subr.mxu0 0.0
        %733 = vmatpush1.xpose.msra.mxu0 0.0
        %734 = vmatprep.subr.mxu0 0.0
        %735 = vmatpush1.xpose.msra.mxu0 0.0
        %736 = vmatprep.subr.mxu0 0.0
        %737 = vmatpush1.xpose.msra.mxu0 %v484
        %738 = vmatprep.subr.mxu0 0.0
        %739 = vmatpush2.xpose.msra.mxu0 0.0
        %740 = vmatprep.subr.mxu0 0.0
        %741 = vmatpush2.xpose.msra.mxu0 0.0
        %742 = vmatprep.subr.mxu0 0.0
        %743 = vmatpush2.xpose.msra.mxu0 0.0
        %744 = vmatprep.subr.mxu0 0.0
        %745 = vmatpush2.xpose.msra.mxu0 0.0
        %746 = vmatprep.subr.mxu0 0.0
        %747 = vmatpush2.xpose.msra.mxu0 0.0
        %748 = vmatprep.subr.mxu0 0.0
        %749 = vmatpush2.xpose.msra.mxu0 0.0
        %750 = vmatprep.subr.mxu0 0.0
        %751 = vmatpush2.xpose.msra.mxu0 0.0
        %752 = vmatprep.subr.mxu0 0.0
        %753 = vmatpush2.xpose.msra.mxu0 0.0
        %754 = vmatprep.subr.mxu0 0.0
        %755 = vmatpush2.xpose.msra.mxu0 0.0
        %756 = vmatprep.subr.mxu0 0.0
        %757 = vmatpush2.xpose.msra.mxu0 0.0
        %758 = vmatprep.subr.mxu0 0.0
        %759 = vmatpush2.xpose.msra.mxu0 0.0
        %760 = vmatprep.subr.mxu0 0.0
        %761 = vmatpush2.xpose.msra.mxu0 0.0
        %762 = vmatprep.subr.mxu0 0.0
        %763 = vmatpush2.xpose.msra.mxu0 0.0
        %764 = vmatprep.subr.mxu0 0.0
        %765 = vmatpush2.xpose.msra.mxu0 0.0
        %766 = vmatprep.subr.mxu0 0.0
        %767 = vmatpush2.xpose.msra.mxu0 0.0
        %768 = vmatprep.subr.mxu0 0.0
        %769 = vmatpush2.xpose.msra.mxu0 0.0
        %770 = vmatprep.mubr.f32.mxu0 0.0
        %771 = vmatmul.mubr.f32.gmra.mxu0 %v337
        %v772 = vpop.f32.mrf.mxu0
        %v773 = vadd.f32 0.0, %v772
        %v774 = vpop.f32.mrf.mxu0
        %775 = vdwg.mxu0
        %v776 = vmul.f32 %v773, 0.31622776
        %vm777 = vcmask 64512
        %v778 = vsel %vm777, %v776, -inf
        %779 = vmax.xlane.f32.xlu0 %v778
        %v780 = vpop.xlane.xlu0 %779
        %v781 = vsub.f32 %v776, %v780
        %v782 = vmul.f32 %v781, 1.442695
        %v783 = vpow.pop %v782
        %v784 = vsel %vm777, %v783, 0.0
        %785 = vadd.xlane.f32.xlu0 %v784
        %v786 = vpop.xlane.xlu0 %785
        %v787 = vrcp.pop %v786
        %v788 = vmul.f32 %v783, %v787
        %v790 = vsel %vm777, %v788, 0
        %792 = vmatprep.subr.mxu0 0.0
        %793 = vmatpush1.msra.mxu0 0.0
        %794 = vmatprep.subr.mxu0 0.0
        %795 = vmatpush1.msra.mxu0 0.0
        %796 = vmatprep.subr.mxu0 0.0
        %797 = vmatpush1.msra.mxu0 0.0
        %798 = vmatprep.subr.mxu0 0.0
        %799 = vmatpush1.msra.mxu0 0.0
        %800 = vmatprep.subr.mxu0 0.0
        %801 = vmatpush1.msra.mxu0 0.0
        %802 = vmatprep.subr.mxu0 0.0
        %803 = vmatpush1.msra.mxu0 0.0
        %804 = vmatprep.subr.mxu0 0.0
        %805 = vmatpush1.msra.mxu0 0.0
        %806 = vmatprep.subr.mxu0 0.0
        %807 = vmatpush1.msra.mxu0 0.0
        %808 = vmatprep.subr.mxu0 0.0
        %809 = vmatpush1.msra.mxu0 0.0
        %810 = vmatprep.subr.mxu0 0.0
        %811 = vmatpush1.msra.mxu0 0.0
        %812 = vmatprep.subr.mxu0 0.0
        %813 = vmatpush1.msra.mxu0 0.0
        %814 = vmatprep.subr.mxu0 0.0
        %815 = vmatpush1.msra.mxu0 0.0
        %816 = vmatprep.subr.mxu0 0.0
        %817 = vmatpush1.msra.mxu0 0.0
        %818 = vmatprep.subr.mxu0 0.0
        %819 = vmatpush1.msra.mxu0 0.0
        %820 = vmatprep.subr.mxu0 0.0
        %821 = vmatpush1.msra.mxu0 0.0
        %822 = vmatprep.subr.mxu0 0.0
        %823 = vmatpush1.msra.mxu0 %v631
        %824 = vmatprep.subr.mxu0 0.0
        %825 = vmatpush2.msra.mxu0 0.0
        %826 = vmatprep.subr.mxu0 0.0
        %827 = vmatpush2.msra.mxu0 0.0
        %828 = vmatprep.subr.mxu0 0.0
        %829 = vmatpush2.msra.mxu0 0.0
        %830 = vmatprep.subr.mxu0 0.0
        %831 = vmatpush2.msra.mxu0 0.0
        %832 = vmatprep.subr.mxu0 0.0
        %833 = vmatpush2.msra.mxu0 0.0
        %834 = vmatprep.subr.mxu0 0.0
        %835 = vmatpush2.msra.mxu0 0.0
        %836 = vmatprep.subr.mxu0 0.0
        %837 = vmatpush2.msra.mxu0 0.0
        %838 = vmatprep.subr.mxu0 0.0
        %839 = vmatpush2.msra.mxu0 0.0
        %840 = vmatprep.subr.mxu0 0.0
        %841 = vmatpush2.msra.mxu0 0.0
        %842 = vmatprep.subr.mxu0 0.0
        %843 = vmatpush2.msra.mxu0 0.0
        %844 = vmatprep.subr.mxu0 0.0
        %845 = vmatpush2.msra.mxu0 0.0
        %846 = vmatprep.subr.mxu0 0.0
        %847 = vmatpush2.msra.mxu0 0.0
        %848 = vmatprep.subr.mxu0 0.0
        %849 = vmatpush2.msra.mxu0 0.0
        %850 = vmatprep.subr.mxu0 0.0
        %851 = vmatpush2.msra.mxu0 0.0
        %852 = vmatprep.subr.mxu0 0.0
        %853 = vmatpush2.msra.mxu0 0.0
        %854 = vmatprep.subr.mxu0 0.0
        %855 = vmatpush2.msra.mxu0 0.0
        %856 = vmatprep.mubr.f32.mxu0 0.0
        %857 = vmatmul.mubr.f32.gmra.mxu0 %v790
        %v858 = vpop.f32.mrf.mxu0
        %v859 = vadd.f32 0.0, %v858
        %v860 = vpop.f32.mrf.mxu0
        %861 = vdwg.mxu0
        %862 = vmatprep.subr.mxu0 0.0
        %863 = vmatpush1.xpose.msra.mxu0 0.0
        %864 = vmatprep.subr.mxu0 0.0
        %865 = vmatpush1.xpose.msra.mxu0 0.0
        %866 = vmatprep.subr.mxu0 0.0
        %867 = vmatpush1.xpose.msra.mxu0 0.0
        %868 = vmatprep.subr.mxu0 0.0
        %869 = vmatpush1.xpose.msra.mxu0 0.0
        %870 = vmatprep.subr.mxu0 0.0
        %871 = vmatpush1.xpose.msra.mxu0 0.0
        %872 = vmatprep.subr.mxu0 0.0
        %873 = vmatpush1.xpose.msra.mxu0 0.0
        %874 = vmatprep.subr.mxu0 0.0
        %875 = vmatpush1.xpose.msra.mxu0 0.0
        %876 = vmatprep.subr.mxu0 0.0
        %877 = vmatpush1.xpose.msra.mxu0 0.0
        %878 = vmatprep.subr.mxu0 0.0
        %879 = vmatpush1.xpose.msra.mxu0 0.0
        %880 = vmatprep.subr.mxu0 0.0
        %881 = vmatpush1.xpose.msra.mxu0 0.0
        %882 = vmatprep.subr.mxu0 0.0
        %883 = vmatpush1.xpose.msra.mxu0 0.0
        %884 = vmatprep.subr.mxu0 0.0
        %885 = vmatpush1.xpose.msra.mxu0 0.0
        %886 = vmatprep.subr.mxu0 0.0
        %887 = vmatpush1.xpose.msra.mxu0 0.0
        %888 = vmatprep.subr.mxu0 0.0
        %889 = vmatpush1.xpose.msra.mxu0 0.0
        %890 = vmatprep.subr.mxu0 0.0
        %891 = vmatpush1.xpose.msra.mxu0 0.0
        %892 = vmatprep.subr.mxu0 0.0
        %893 = vmatpush1.xpose.msra.mxu0 %v486
        %894 = vmatprep.subr.mxu0 0.0
        %895 = vmatpush2.xpose.msra.mxu0 0.0
        %896 = vmatprep.subr.mxu0 0.0
        %897 = vmatpush2.xpose.msra.mxu0 0.0
        %898 = vmatprep.subr.mxu0 0.0
        %899 = vmatpush2.xpose.msra.mxu0 0.0
        %900 = vmatprep.subr.mxu0 0.0
        %901 = vmatpush2.xpose.msra.mxu0 0.0
        %902 = vmatprep.subr.mxu0 0.0
        %903 = vmatpush2.xpose.msra.mxu0 0.0
        %904 = vmatprep.subr.mxu0 0.0
        %905 = vmatpush2.xpose.msra.mxu0 0.0
        %906 = vmatprep.subr.mxu0 0.0
        %907 = vmatpush2.xpose.msra.mxu0 0.0
        %908 = vmatprep.subr.mxu0 0.0
        %909 = vmatpush2.xpose.msra.mxu0 0.0
        %910 = vmatprep.subr.mxu0 0.0
        %911 = vmatpush2.xpose.msra.mxu0 0.0
        %912 = vmatprep.subr.mxu0 0.0
        %913 = vmatpush2.xpose.msra.mxu0 0.0
        %914 = vmatprep.subr.mxu0 0.0
        %915 = vmatpush2.xpose.msra.mxu0 0.0
        %916 = vmatprep.subr.mxu0 0.0
        %917 = vmatpush2.xpose.msra.mxu0 0.0
        %918 = vmatprep.subr.mxu0 0.0
        %919 = vmatpush2.xpose.msra.mxu0 0.0
        %920 = vmatprep.subr.mxu0 0.0
        %921 = vmatpush2.xpose.msra.mxu0 0.0
        %922 = vmatprep.subr.mxu0 0.0
        %923 = vmatpush2.xpose.msra.mxu0 0.0
        %924 = vmatprep.subr.mxu0 0.0
        %925 = vmatpush2.xpose.msra.mxu0 0.0
        %926 = vmatprep.mubr.f32.mxu0 0.0
        %927 = vmatmul.mubr.f32.gmra.mxu0 %v339
        %v928 = vpop.f32.mrf.mxu0
        %v929 = vadd.f32 0.0, %v928
        %v930 = vpop.f32.mrf.mxu0
        %931 = vdwg.mxu0
        %v932 = vmul.f32 %v929, 0.31622776
        %v933 = vsel %vm777, %v932, -inf
        %934 = vmax.xlane.f32.xlu0 %v933
        %v935 = vpop.xlane.xlu0 %934
        %v936 = vsub.f32 %v932, %v935
        %v937 = vmul.f32 %v936, 1.442695
        %v938 = vpow.pop %v937
        %v939 = vsel %vm777, %v938, 0.0
        %940 = vadd.xlane.f32.xlu0 %v939
        %v941 = vpop.xlane.xlu0 %940
        %v942 = vrcp.pop %v941
        %v943 = vmul.f32 %v938, %v942
        %v945 = vsel %vm777, %v943, 0
        %947 = vmatprep.subr.mxu0 0.0
        %948 = vmatpush1.msra.mxu0 0.0
        %949 = vmatprep.subr.mxu0 0.0
        %950 = vmatpush1.msra.mxu0 0.0
        %951 = vmatprep.subr.mxu0 0.0
        %952 = vmatpush1.msra.mxu0 0.0
        %953 = vmatprep.subr.mxu0 0.0
        %954 = vmatpush1.msra.mxu0 0.0
        %955 = vmatprep.subr.mxu0 0.0
        %956 = vmatpush1.msra.mxu0 0.0
        %957 = vmatprep.subr.mxu0 0.0
        %958 = vmatpush1.msra.mxu0 0.0
        %959 = vmatprep.subr.mxu0 0.0
        %960 = vmatpush1.msra.mxu0 0.0
        %961 = vmatprep.subr.mxu0 0.0
        %962 = vmatpush1.msra.mxu0 0.0
        %963 = vmatprep.subr.mxu0 0.0
        %964 = vmatpush1.msra.mxu0 0.0
        %965 = vmatprep.subr.mxu0 0.0
        %966 = vmatpush1.msra.mxu0 0.0
        %967 = vmatprep.subr.mxu0 0.0
        %968 = vmatpush1.msra.mxu0 0.0
        %969 = vmatprep.subr.mxu0 0.0
        %970 = vmatpush1.msra.mxu0 0.0
        %971 = vmatprep.subr.mxu0 0.0
        %972 = vmatpush1.msra.mxu0 0.0
        %973 = vmatprep.subr.mxu0 0.0
        %974 = vmatpush1.msra.mxu0 0.0
        %975 = vmatprep.subr.mxu0 0.0
        %976 = vmatpush1.msra.mxu0 0.0
        %977 = vmatprep.subr.mxu0 0.0
        %978 = vmatpush1.msra.mxu0 %v633
        %979 = vmatprep.subr.mxu0 0.0
        %980 = vmatpush2.msra.mxu0 0.0
        %981 = vmatprep.subr.mxu0 0.0
        %982 = vmatpush2.msra.mxu0 0.0
        %983 = vmatprep.subr.mxu0 0.0
        %984 = vmatpush2.msra.mxu0 0.0
        %985 = vmatprep.subr.mxu0 0.0
        %986 = vmatpush2.msra.mxu0 0.0
        %987 = vmatprep.subr.mxu0 0.0
        %988 = vmatpush2.msra.mxu0 0.0
        %989 = vmatprep.subr.mxu0 0.0
        %990 = vmatpush2.msra.mxu0 0.0
        %991 = vmatprep.subr.mxu0 0.0
        %992 = vmatpush2.msra.mxu0 0.0
        %993 = vmatprep.subr.mxu0 0.0
        %994 = vmatpush2.msra.mxu0 0.0
        %995 = vmatprep.subr.mxu0 0.0
        %996 = vmatpush2.msra.mxu0 0.0
        %997 = vmatprep.subr.mxu0 0.0
        %998 = vmatpush2.msra.mxu0 0.0
        %999 = vmatprep.subr.mxu0 0.0
        %1000 = vmatpush2.msra.mxu0 0.0
        %1001 = vmatprep.subr.mxu0 0.0
        %1002 = vmatpush2.msra.mxu0 0.0
        %1003 = vmatprep.subr.mxu0 0.0
        %1004 = vmatpush2.msra.mxu0 0.0
        %1005 = vmatprep.subr.mxu0 0.0
        %1006 = vmatpush2.msra.mxu0 0.0
        %1007 = vmatprep.subr.mxu0 0.0
        %1008 = vmatpush2.msra.mxu0 0.0
        %1009 = vmatprep.subr.mxu0 0.0
        %1010 = vmatpush2.msra.mxu0 0.0
        %1011 = vmatprep.mubr.f32.mxu0 0.0
        %1012 = vmatmul.mubr.f32.gmra.mxu0 %v945
        %v1013 = vpop.f32.mrf.mxu0
        %v1014 = vadd.f32 0.0, %v1013
        %v1015 = vpop.f32.mrf.mxu0
        %1016 = vdwg.mxu0
        %1017 = vmatprep.subr.mxu0 0.0
        %1018 = vmatpush1.xpose.msra.mxu0 0.0
        %1019 = vmatprep.subr.mxu0 0.0
        %1020 = vmatpush1.xpose.msra.mxu0 0.0
        %1021 = vmatprep.subr.mxu0 0.0
        %1022 = vmatpush1.xpose.msra.mxu0 0.0
        %1023 = vmatprep.subr.mxu0 0.0
        %1024 = vmatpush1.xpose.msra.mxu0 0.0
        %1025 = vmatprep.subr.mxu0 0.0
        %1026 = vmatpush1.xpose.msra.mxu0 0.0
        %1027 = vmatprep.subr.mxu0 0.0
        %1028 = vmatpush1.xpose.msra.mxu0 0.0
        %1029 = vmatprep.subr.mxu0 0.0
        %1030 = vmatpush1.xpose.msra.mxu0 0.0
        %1031 = vmatprep.subr.mxu0 0.0
        %1032 = vmatpush1.xpose.msra.mxu0 0.0
        %1033 = vmatprep.subr.mxu0 0.0
        %1034 = vmatpush1.xpose.msra.mxu0 0.0
        %1035 = vmatprep.subr.mxu0 0.0
        %1036 = vmatpush1.xpose.msra.mxu0 0.0
        %1037 = vmatprep.subr.mxu0 0.0
        %1038 = vmatpush1.xpose.msra.mxu0 0.0
        %1039 = vmatprep.subr.mxu0 0.0
        %1040 = vmatpush1.xpose.msra.mxu0 0.0
        %1041 = vmatprep.subr.mxu0 0.0
        %1042 = vmatpush1.xpose.msra.mxu0 0.0
        %1043 = vmatprep.subr.mxu0 0.0
        %1044 = vmatpush1.xpose.msra.mxu0 0.0
        %1045 = vmatprep.subr.mxu0 0.0
        %1046 = vmatpush1.xpose.msra.mxu0 0.0
        %1047 = vmatprep.subr.mxu0 0.0
        %1048 = vmatpush1.xpose.msra.mxu0 %v555
        %1049 = vmatprep.subr.mxu0 0.0
        %1050 = vmatpush2.xpose.msra.mxu0 0.0
        %1051 = vmatprep.subr.mxu0 0.0
        %1052 = vmatpush2.xpose.msra.mxu0 0.0
        %1053 = vmatprep.subr.mxu0 0.0
        %1054 = vmatpush2.xpose.msra.mxu0 0.0
        %1055 = vmatprep.subr.mxu0 0.0
        %1056 = vmatpush2.xpose.msra.mxu0 0.0
        %1057 = vmatprep.subr.mxu0 0.0
        %1058 = vmatpush2.xpose.msra.mxu0 0.0
        %1059 = vmatprep.subr.mxu0 0.0
        %1060 = vmatpush2.xpose.msra.mxu0 0.0
        %1061 = vmatprep.subr.mxu0 0.0
        %1062 = vmatpush2.xpose.msra.mxu0 0.0
        %1063 = vmatprep.subr.mxu0 0.0
        %1064 = vmatpush2.xpose.msra.mxu0 0.0
        %1065 = vmatprep.subr.mxu0 0.0
        %1066 = vmatpush2.xpose.msra.mxu0 0.0
        %1067 = vmatprep.subr.mxu0 0.0
        %1068 = vmatpush2.xpose.msra.mxu0 0.0
        %1069 = vmatprep.subr.mxu0 0.0
        %1070 = vmatpush2.xpose.msra.mxu0 0.0
        %1071 = vmatprep.subr.mxu0 0.0
        %1072 = vmatpush2.xpose.msra.mxu0 0.0
        %1073 = vmatprep.subr.mxu0 0.0
        %1074 = vmatpush2.xpose.msra.mxu0 0.0
        %1075 = vmatprep.subr.mxu0 0.0
        %1076 = vmatpush2.xpose.msra.mxu0 0.0
        %1077 = vmatprep.subr.mxu0 0.0
        %1078 = vmatpush2.xpose.msra.mxu0 0.0
        %1079 = vmatprep.subr.mxu0 0.0
        %1080 = vmatpush2.xpose.msra.mxu0 0.0
        %1081 = vmatprep.mubr.f32.mxu0 0.0
        %1082 = vmatmul.mubr.f32.gmra.mxu0 %v408
        %v1083 = vpop.f32.mrf.mxu0
        %v1084 = vadd.f32 0.0, %v1083
        %v1085 = vpop.f32.mrf.mxu0
        %1086 = vdwg.mxu0
        %v1087 = vmul.f32 %v1084, 0.31622776
        %v1088 = vsel %vm777, %v1087, -inf
        %1089 = vmax.xlane.f32.xlu0 %v1088
        %v1090 = vpop.xlane.xlu0 %1089
        %v1091 = vsub.f32 %v1087, %v1090
        %v1092 = vmul.f32 %v1091, 1.442695
        %v1093 = vpow.pop %v1092
        %v1094 = vsel %vm777, %v1093, 0.0
        %1095 = vadd.xlane.f32.xlu0 %v1094
        %v1096 = vpop.xlane.xlu0 %1095
        %v1097 = vrcp.pop %v1096
        %v1098 = vmul.f32 %v1093, %v1097
        %v1100 = vsel %vm777, %v1098, 0
        %1102 = vmatprep.subr.mxu0 0.0
        %1103 = vmatpush1.msra.mxu0 0.0
        %1104 = vmatprep.subr.mxu0 0.0
        %1105 = vmatpush1.msra.mxu0 0.0
        %1106 = vmatprep.subr.mxu0 0.0
        %1107 = vmatpush1.msra.mxu0 0.0
        %1108 = vmatprep.subr.mxu0 0.0
        %1109 = vmatpush1.msra.mxu0 0.0
        %1110 = vmatprep.subr.mxu0 0.0
        %1111 = vmatpush1.msra.mxu0 0.0
        %1112 = vmatprep.subr.mxu0 0.0
        %1113 = vmatpush1.msra.mxu0 0.0
        %1114 = vmatprep.subr.mxu0 0.0
        %1115 = vmatpush1.msra.mxu0 0.0
        %1116 = vmatprep.subr.mxu0 0.0
        %1117 = vmatpush1.msra.mxu0 0.0
        %1118 = vmatprep.subr.mxu0 0.0
        %1119 = vmatpush1.msra.mxu0 0.0
        %1120 = vmatprep.subr.mxu0 0.0
        %1121 = vmatpush1.msra.mxu0 0.0
        %1122 = vmatprep.subr.mxu0 0.0
        %1123 = vmatpush1.msra.mxu0 0.0
        %1124 = vmatprep.subr.mxu0 0.0
        %1125 = vmatpush1.msra.mxu0 0.0
        %1126 = vmatprep.subr.mxu0 0.0
        %1127 = vmatpush1.msra.mxu0 0.0
        %1128 = vmatprep.subr.mxu0 0.0
        %1129 = vmatpush1.msra.mxu0 0.0
        %1130 = vmatprep.subr.mxu0 0.0
        %1131 = vmatpush1.msra.mxu0 0.0
        %1132 = vmatprep.subr.mxu0 0.0
        %1133 = vmatpush1.msra.mxu0 %v702
        %1134 = vmatprep.subr.mxu0 0.0
        %1135 = vmatpush2.msra.mxu0 0.0
        %1136 = vmatprep.subr.mxu0 0.0
        %1137 = vmatpush2.msra.mxu0 0.0
        %1138 = vmatprep.subr.mxu0 0.0
        %1139 = vmatpush2.msra.mxu0 0.0
        %1140 = vmatprep.subr.mxu0 0.0
        %1141 = vmatpush2.msra.mxu0 0.0
        %1142 = vmatprep.subr.mxu0 0.0
        %1143 = vmatpush2.msra.mxu0 0.0
        %1144 = vmatprep.subr.mxu0 0.0
        %1145 = vmatpush2.msra.mxu0 0.0
        %1146 = vmatprep.subr.mxu0 0.0
        %1147 = vmatpush2.msra.mxu0 0.0
        %1148 = vmatprep.subr.mxu0 0.0
        %1149 = vmatpush2.msra.mxu0 0.0
        %1150 = vmatprep.subr.mxu0 0.0
        %1151 = vmatpush2.msra.mxu0 0.0
        %1152 = vmatprep.subr.mxu0 0.0
        %1153 = vmatpush2.msra.mxu0 0.0
        %1154 = vmatprep.subr.mxu0 0.0
        %1155 = vmatpush2.msra.mxu0 0.0
        %1156 = vmatprep.subr.mxu0 0.0
        %1157 = vmatpush2.msra.mxu0 0.0
        %1158 = vmatprep.subr.mxu0 0.0
        %1159 = vmatpush2.msra.mxu0 0.0
        %1160 = vmatprep.subr.mxu0 0.0
        %1161 = vmatpush2.msra.mxu0 0.0
        %1162 = vmatprep.subr.mxu0 0.0
        %1163 = vmatpush2.msra.mxu0 0.0
        %1164 = vmatprep.subr.mxu0 0.0
        %1165 = vmatpush2.msra.mxu0 0.0
        %1166 = vmatprep.mubr.f32.mxu0 0.0
        %1167 = vmatmul.mubr.f32.gmra.mxu0 %v1100
        %v1168 = vpop.f32.mrf.mxu0
        %v1169 = vadd.f32 0.0, %v1168
        %v1170 = vpop.f32.mrf.mxu0
        %1171 = vdwg.mxu0
        %1172 = vmatprep.subr.mxu0 0.0
        %1173 = vmatpush1.xpose.msra.mxu0 0.0
        %1174 = vmatprep.subr.mxu0 0.0
        %1175 = vmatpush1.xpose.msra.mxu0 0.0
        %1176 = vmatprep.subr.mxu0 0.0
        %1177 = vmatpush1.xpose.msra.mxu0 0.0
        %1178 = vmatprep.subr.mxu0 0.0
        %1179 = vmatpush1.xpose.msra.mxu0 0.0
        %1180 = vmatprep.subr.mxu0 0.0
        %1181 = vmatpush1.xpose.msra.mxu0 0.0
        %1182 = vmatprep.subr.mxu0 0.0
        %1183 = vmatpush1.xpose.msra.mxu0 0.0
        %1184 = vmatprep.subr.mxu0 0.0
        %1185 = vmatpush1.xpose.msra.mxu0 0.0
        %1186 = vmatprep.subr.mxu0 0.0
        %1187 = vmatpush1.xpose.msra.mxu0 0.0
        %1188 = vmatprep.subr.mxu0 0.0
        %1189 = vmatpush1.xpose.msra.mxu0 0.0
        %1190 = vmatprep.subr.mxu0 0.0
        %1191 = vmatpush1.xpose.msra.mxu0 0.0
        %1192 = vmatprep.subr.mxu0 0.0
        %1193 = vmatpush1.xpose.msra.mxu0 0.0
        %1194 = vmatprep.subr.mxu0 0.0
        %1195 = vmatpush1.xpose.msra.mxu0 0.0
        %1196 = vmatprep.subr.mxu0 0.0
        %1197 = vmatpush1.xpose.msra.mxu0 0.0
        %1198 = vmatprep.subr.mxu0 0.0
        %1199 = vmatpush1.xpose.msra.mxu0 0.0
        %1200 = vmatprep.subr.mxu0 0.0
        %1201 = vmatpush1.xpose.msra.mxu0 0.0
        %1202 = vmatprep.subr.mxu0 0.0
        %1203 = vmatpush1.xpose.msra.mxu0 %v557
        %1204 = vmatprep.subr.mxu0 0.0
        %1205 = vmatpush2.xpose.msra.mxu0 0.0
        %1206 = vmatprep.subr.mxu0 0.0
        %1207 = vmatpush2.xpose.msra.mxu0 0.0
        %1208 = vmatprep.subr.mxu0 0.0
        %1209 = vmatpush2.xpose.msra.mxu0 0.0
        %1210 = vmatprep.subr.mxu0 0.0
        %1211 = vmatpush2.xpose.msra.mxu0 0.0
        %1212 = vmatprep.subr.mxu0 0.0
        %1213 = vmatpush2.xpose.msra.mxu0 0.0
        %1214 = vmatprep.subr.mxu0 0.0
        %1215 = vmatpush2.xpose.msra.mxu0 0.0
        %1216 = vmatprep.subr.mxu0 0.0
        %1217 = vmatpush2.xpose.msra.mxu0 0.0
        %1218 = vmatprep.subr.mxu0 0.0
        %1219 = vmatpush2.xpose.msra.mxu0 0.0
        %1220 = vmatprep.subr.mxu0 0.0
        %1221 = vmatpush2.xpose.msra.mxu0 0.0
        %1222 = vmatprep.subr.mxu0 0.0
        %1223 = vmatpush2.xpose.msra.mxu0 0.0
        %1224 = vmatprep.subr.mxu0 0.0
        %1225 = vmatpush2.xpose.msra.mxu0 0.0
        %1226 = vmatprep.subr.mxu0 0.0
        %1227 = vmatpush2.xpose.msra.mxu0 0.0
        %1228 = vmatprep.subr.mxu0 0.0
        %1229 = vmatpush2.xpose.msra.mxu0 0.0
        %1230 = vmatprep.subr.mxu0 0.0
        %1231 = vmatpush2.xpose.msra.mxu0 0.0
        %1232 = vmatprep.subr.mxu0 0.0
        %1233 = vmatpush2.xpose.msra.mxu0 0.0
        %1234 = vmatprep.subr.mxu0 0.0
        %1235 = vmatpush2.xpose.msra.mxu0 0.0
        %1236 = vmatprep.mubr.f32.mxu0 0.0
        %1237 = vmatmul.mubr.f32.gmra.mxu0 %v410
        %v1238 = vpop.f32.mrf.mxu0
        %v1239 = vadd.f32 0.0, %v1238
        %v1240 = vpop.f32.mrf.mxu0
        %1241 = vdwg.mxu0
        %v1242 = vmul.f32 %v1239, 0.31622776
        %v1243 = vsel %vm777, %v1242, -inf
        %1244 = vmax.xlane.f32.xlu0 %v1243
        %v1245 = vpop.xlane.xlu0 %1244
        %v1246 = vsub.f32 %v1242, %v1245
        %v1247 = vmul.f32 %v1246, 1.442695
        %v1248 = vpow.pop %v1247
        %v1249 = vsel %vm777, %v1248, 0.0
        %1250 = vadd.xlane.f32.xlu0 %v1249
        %v1251 = vpop.xlane.xlu0 %1250
        %v1252 = vrcp.pop %v1251
        %v1253 = vmul.f32 %v1248, %v1252
        %v1255 = vsel %vm777, %v1253, 0
        %1257 = vmatprep.subr.mxu0 0.0
        %1258 = vmatpush1.msra.mxu0 0.0
        %1259 = vmatprep.subr.mxu0 0.0
        %1260 = vmatpush1.msra.mxu0 0.0
        %1261 = vmatprep.subr.mxu0 0.0
        %1262 = vmatpush1.msra.mxu0 0.0
        %1263 = vmatprep.subr.mxu0 0.0
        %1264 = vmatpush1.msra.mxu0 0.0
        %1265 = vmatprep.subr.mxu0 0.0
        %1266 = vmatpush1.msra.mxu0 0.0
        %1267 = vmatprep.subr.mxu0 0.0
        %1268 = vmatpush1.msra.mxu0 0.0
        %1269 = vmatprep.subr.mxu0 0.0
        %1270 = vmatpush1.msra.mxu0 0.0
        %1271 = vmatprep.subr.mxu0 0.0
        %1272 = vmatpush1.msra.mxu0 0.0
        %1273 = vmatprep.subr.mxu0 0.0
        %1274 = vmatpush1.msra.mxu0 0.0
        %1275 = vmatprep.subr.mxu0 0.0
        %1276 = vmatpush1.msra.mxu0 0.0
        %1277 = vmatprep.subr.mxu0 0.0
        %1278 = vmatpush1.msra.mxu0 0.0
        %1279 = vmatprep.subr.mxu0 0.0
        %1280 = vmatpush1.msra.mxu0 0.0
        %1281 = vmatprep.subr.mxu0 0.0
        %1282 = vmatpush1.msra.mxu0 0.0
        %1283 = vmatprep.subr.mxu0 0.0
        %1284 = vmatpush1.msra.mxu0 0.0
        %1285 = vmatprep.subr.mxu0 0.0
        %1286 = vmatpush1.msra.mxu0 0.0
        %1287 = vmatprep.subr.mxu0 0.0
        %1288 = vmatpush1.msra.mxu0 %v704
        %1289 = vmatprep.subr.mxu0 0.0
        %1290 = vmatpush2.msra.mxu0 0.0
        %1291 = vmatprep.subr.mxu0 0.0
        %1292 = vmatpush2.msra.mxu0 0.0
        %1293 = vmatprep.subr.mxu0 0.0
        %1294 = vmatpush2.msra.mxu0 0.0
        %1295 = vmatprep.subr.mxu0 0.0
        %1296 = vmatpush2.msra.mxu0 0.0
        %1297 = vmatprep.subr.mxu0 0.0
        %1298 = vmatpush2.msra.mxu0 0.0
        %1299 = vmatprep.subr.mxu0 0.0
        %1300 = vmatpush2.msra.mxu0 0.0
        %1301 = vmatprep.subr.mxu0 0.0
        %1302 = vmatpush2.msra.mxu0 0.0
        %1303 = vmatprep.subr.mxu0 0.0
        %1304 = vmatpush2.msra.mxu0 0.0
        %1305 = vmatprep.subr.mxu0 0.0
        %1306 = vmatpush2.msra.mxu0 0.0
        %1307 = vmatprep.subr.mxu0 0.0
        %1308 = vmatpush2.msra.mxu0 0.0
        %1309 = vmatprep.subr.mxu0 0.0
        %1310 = vmatpush2.msra.mxu0 0.0
        %1311 = vmatprep.subr.mxu0 0.0
        %1312 = vmatpush2.msra.mxu0 0.0
        %1313 = vmatprep.subr.mxu0 0.0
        %1314 = vmatpush2.msra.mxu0 0.0
        %1315 = vmatprep.subr.mxu0 0.0
        %1316 = vmatpush2.msra.mxu0 0.0
        %1317 = vmatprep.subr.mxu0 0.0
        %1318 = vmatpush2.msra.mxu0 0.0
        %1319 = vmatprep.subr.mxu0 0.0
        %1320 = vmatpush2.msra.mxu0 0.0
        %1321 = vmatprep.mubr.f32.mxu0 0.0
        %1322 = vmatmul.mubr.f32.gmra.mxu0 %v1255
        %v1323 = vpop.f32.mrf.mxu0
        %v1324 = vadd.f32 0.0, %v1323
        %v1325 = vpop.f32.mrf.mxu0
        %1326 = vdwg.mxu0
        %v1327 = vld [vmem:[#allocation7] sm:$0xff]
        %v1328 = vld [vmem:[#allocation7 + $0x8] sm:$0xff]
        %v1329 = vld [vmem:[#allocation7 + $0x10] sm:$0xff]
        %v1330 = vld [vmem:[#allocation7 + $0x18] sm:$0xff]
        %v1331 = vld [vmem:[#allocation7 + $0x20] sm:$0xff]
        %v1332 = vld [vmem:[#allocation7 + $0x28] sm:$0xff]
        %v1333 = vld [vmem:[#allocation7 + $0x30] sm:$0xff]
        %v1334 = vld [vmem:[#allocation7 + $0x38] sm:$0xff]
        %v1335 = vld [vmem:[#allocation7 + $0x40] sm:$0xff]
        %v1336 = vld [vmem:[#allocation7 + $0x48] sm:$0xff]
        %v1337 = vld [vmem:[#allocation7 + $0x50] sm:$0xff]
        %v1338 = vld [vmem:[#allocation7 + $0x58] sm:$0xff]
        %v1339 = vld [vmem:[#allocation7 + $0x60] sm:$0xff]
        %v1340 = vld [vmem:[#allocation7 + $0x68] sm:$0xff]
        %v1341 = vld [vmem:[#allocation7 + $0x70] sm:$0xff]
        %v1342 = vld [vmem:[#allocation7 + $0x78] sm:$0xff]
        %v1343 = vld [vmem:[#allocation7 + $0x80] sm:$0xff]
        %v1344 = vld [vmem:[#allocation7 + $0x88] sm:$0xff]
        %v1345 = vld [vmem:[#allocation7 + $0x90] sm:$0xff]
        %v1346 = vld [vmem:[#allocation7 + $0x98] sm:$0xff]
        %v1347 = vld [vmem:[#allocation7 + $0xa0] sm:$0xff]
        %v1348 = vld [vmem:[#allocation7 + $0xa8] sm:$0xff]
        %v1349 = vld [vmem:[#allocation7 + $0xb0] sm:$0xff]
        %v1350 = vld [vmem:[#allocation7 + $0xb8] sm:$0xff]
        %v1351 = vld [vmem:[#allocation7 + $0xc0] sm:$0xff]
        %v1352 = vld [vmem:[#allocation7 + $0xc8] sm:$0xff]
        %v1353 = vld [vmem:[#allocation7 + $0xd0] sm:$0xff]
        %v1354 = vld [vmem:[#allocation7 + $0xd8] sm:$0xff]
        %v1355 = vld [vmem:[#allocation7 + $0xe0] sm:$0xff]
        %v1356 = vld [vmem:[#allocation7 + $0xe8] sm:$0xff]
        %v1357 = vld [vmem:[#allocation7 + $0xf0] sm:$0xff]
        %v1358 = vld [vmem:[#allocation7 + $0xf8] sm:$0xff]
        %v1359 = vld [vmem:[#allocation7 + $0x100] sm:$0xff]
        %v1360 = vld [vmem:[#allocation7 + $0x108] sm:$0xff]
        %v1361 = vld [vmem:[#allocation7 + $0x110] sm:$0xff]
        %v1362 = vld [vmem:[#allocation7 + $0x118] sm:$0xff]
        %v1363 = vld [vmem:[#allocation7 + $0x120] sm:$0xff]
        %v1364 = vld [vmem:[#allocation7 + $0x128] sm:$0xff]
        %v1365 = vld [vmem:[#allocation7 + $0x130] sm:$0xff]
        %v1366 = vld [vmem:[#allocation7 + $0x138] sm:$0xff]
        %v1367 = vld [vmem:[#allocation7 + $0x140] sm:$0xff]
        %v1368 = vld [vmem:[#allocation7 + $0x148] sm:$0xff]
        %v1369 = vld [vmem:[#allocation7 + $0x150] sm:$0xff]
        %v1370 = vld [vmem:[#allocation7 + $0x158] sm:$0xff]
        %v1371 = vld [vmem:[#allocation7 + $0x160] sm:$0xff]
        %v1372 = vld [vmem:[#allocation7 + $0x168] sm:$0xff]
        %v1373 = vld [vmem:[#allocation7 + $0x170] sm:$0xff]
        %v1374 = vld [vmem:[#allocation7 + $0x178] sm:$0xff]
        %v1375 = vld [vmem:[#allocation7 + $0x180] sm:$0xff]
        %v1376 = vld [vmem:[#allocation7 + $0x188] sm:$0xff]
        %v1377 = vld [vmem:[#allocation7 + $0x190] sm:$0xff]
        %v1378 = vld [vmem:[#allocation7 + $0x198] sm:$0xff]
        %v1379 = vld [vmem:[#allocation7 + $0x1a0] sm:$0xff]
        %v1380 = vld [vmem:[#allocation7 + $0x1a8] sm:$0xff]
        %v1381 = vld [vmem:[#allocation7 + $0x1b0] sm:$0xff]
        %v1382 = vld [vmem:[#allocation7 + $0x1b8] sm:$0xff]
        %v1383 = vld [vmem:[#allocation7 + $0x1c0] sm:$0xff]
        %v1384 = vld [vmem:[#allocation7 + $0x1c8] sm:$0xff]
        %v1385 = vld [vmem:[#allocation7 + $0x1d0] sm:$0xff]
        %v1386 = vld [vmem:[#allocation7 + $0x1d8] sm:$0xff]
        %v1387 = vld [vmem:[#allocation7 + $0x1e0] sm:$0xff]
        %v1388 = vld [vmem:[#allocation7 + $0x1e8] sm:$0xff]
        %v1389 = vld [vmem:[#allocation7 + $0x1f0] sm:$0xff]
        %v1390 = vld [vmem:[#allocation7 + $0x1f8] sm:$0xff]
        %1391 = vmatprep.subr.mxu0 0.0
        %1392 = vmatpush1.msra.mxu0 %v1342
        %1393 = vmatprep.subr.mxu0 0.0
        %1394 = vmatpush1.msra.mxu0 %v1341
        %1395 = vmatprep.subr.mxu0 0.0
        %1396 = vmatpush1.msra.mxu0 %v1340
        %1397 = vmatprep.subr.mxu0 0.0
        %1398 = vmatpush1.msra.mxu0 %v1339
        %1399 = vmatprep.subr.mxu0 0.0
        %1400 = vmatpush1.msra.mxu0 %v1338
        %1401 = vmatprep.subr.mxu0 0.0
        %1402 = vmatpush1.msra.mxu0 %v1337
        %1403 = vmatprep.subr.mxu0 0.0
        %1404 = vmatpush1.msra.mxu0 %v1336
        %1405 = vmatprep.subr.mxu0 0.0
        %1406 = vmatpush1.msra.mxu0 %v1335
        %1407 = vmatprep.subr.mxu0 0.0
        %1408 = vmatpush1.msra.mxu0 %v1334
        %1409 = vmatprep.subr.mxu0 0.0
        %1410 = vmatpush1.msra.mxu0 %v1333
        %1411 = vmatprep.subr.mxu0 0.0
        %1412 = vmatpush1.msra.mxu0 %v1332
        %1413 = vmatprep.subr.mxu0 0.0
        %1414 = vmatpush1.msra.mxu0 %v1331
        %1415 = vmatprep.subr.mxu0 0.0
        %1416 = vmatpush1.msra.mxu0 %v1330
        %1417 = vmatprep.subr.mxu0 0.0
        %1418 = vmatpush1.msra.mxu0 %v1329
        %1419 = vmatprep.subr.mxu0 0.0
        %1420 = vmatpush1.msra.mxu0 %v1328
        %1421 = vmatprep.subr.mxu0 0.0
        %1422 = vmatpush1.msra.mxu0 %v1327
        %1423 = vmatprep.subr.mxu0 0.0
        %1424 = vmatpush2.msra.mxu0 %v1358
        %1425 = vmatprep.subr.mxu0 0.0
        %1426 = vmatpush2.msra.mxu0 %v1357
        %1427 = vmatprep.subr.mxu0 0.0
        %1428 = vmatpush2.msra.mxu0 %v1356
        %1429 = vmatprep.subr.mxu0 0.0
        %1430 = vmatpush2.msra.mxu0 %v1355
        %1431 = vmatprep.subr.mxu0 0.0
        %1432 = vmatpush2.msra.mxu0 %v1354
        %1433 = vmatprep.subr.mxu0 0.0
        %1434 = vmatpush2.msra.mxu0 %v1353
        %1435 = vmatprep.subr.mxu0 0.0
        %1436 = vmatpush2.msra.mxu0 %v1352
        %1437 = vmatprep.subr.mxu0 0.0
        %1438 = vmatpush2.msra.mxu0 %v1351
        %1439 = vmatprep.subr.mxu0 0.0
        %1440 = vmatpush2.msra.mxu0 %v1350
        %1441 = vmatprep.subr.mxu0 0.0
        %1442 = vmatpush2.msra.mxu0 %v1349
        %1443 = vmatprep.subr.mxu0 0.0
        %1444 = vmatpush2.msra.mxu0 %v1348
        %1445 = vmatprep.subr.mxu0 0.0
        %1446 = vmatpush2.msra.mxu0 %v1347
        %1447 = vmatprep.subr.mxu0 0.0
        %1448 = vmatpush2.msra.mxu0 %v1346
        %1449 = vmatprep.subr.mxu0 0.0
        %1450 = vmatpush2.msra.mxu0 %v1345
        %1451 = vmatprep.subr.mxu0 0.0
        %1452 = vmatpush2.msra.mxu0 %v1344
        %1453 = vmatprep.subr.mxu0 0.0
        %1454 = vmatpush2.msra.mxu0 %v1343
        %1455 = vmatprep.mubr.f32.mxu0 %v1014
        %1456 = vmatmul.mubr.f32.gmra.mxu0 %v859
        %v1457 = vpop.f32.mrf.mxu0
        %v1458 = vadd.f32 0.0, %v1457
        %v1459 = vpop.f32.mrf.mxu0
        %1460 = vdwg.mxu0
        %1461 = vmatprep.subr.mxu0 0.0
        %1462 = vmatpush1.msra.mxu0 %v1374
        %1463 = vmatprep.subr.mxu0 0.0
        %1464 = vmatpush1.msra.mxu0 %v1373
        %1465 = vmatprep.subr.mxu0 0.0
        %1466 = vmatpush1.msra.mxu0 %v1372
        %1467 = vmatprep.subr.mxu0 0.0
        %1468 = vmatpush1.msra.mxu0 %v1371
        %1469 = vmatprep.subr.mxu0 0.0
        %1470 = vmatpush1.msra.mxu0 %v1370
        %1471 = vmatprep.subr.mxu0 0.0
        %1472 = vmatpush1.msra.mxu0 %v1369
        %1473 = vmatprep.subr.mxu0 0.0
        %1474 = vmatpush1.msra.mxu0 %v1368
        %1475 = vmatprep.subr.mxu0 0.0
        %1476 = vmatpush1.msra.mxu0 %v1367
        %1477 = vmatprep.subr.mxu0 0.0
        %1478 = vmatpush1.msra.mxu0 %v1366
        %1479 = vmatprep.subr.mxu0 0.0
        %1480 = vmatpush1.msra.mxu0 %v1365
        %1481 = vmatprep.subr.mxu0 0.0
        %1482 = vmatpush1.msra.mxu0 %v1364
        %1483 = vmatprep.subr.mxu0 0.0
        %1484 = vmatpush1.msra.mxu0 %v1363
        %1485 = vmatprep.subr.mxu0 0.0
        %1486 = vmatpush1.msra.mxu0 %v1362
        %1487 = vmatprep.subr.mxu0 0.0
        %1488 = vmatpush1.msra.mxu0 %v1361
        %1489 = vmatprep.subr.mxu0 0.0
        %1490 = vmatpush1.msra.mxu0 %v1360
        %1491 = vmatprep.subr.mxu0 0.0
        %1492 = vmatpush1.msra.mxu0 %v1359
        %1493 = vmatprep.subr.mxu0 0.0
        %1494 = vmatpush2.msra.mxu0 %v1390
        %1495 = vmatprep.subr.mxu0 0.0
        %1496 = vmatpush2.msra.mxu0 %v1389
        %1497 = vmatprep.subr.mxu0 0.0
        %1498 = vmatpush2.msra.mxu0 %v1388
        %1499 = vmatprep.subr.mxu0 0.0
        %1500 = vmatpush2.msra.mxu0 %v1387
        %1501 = vmatprep.subr.mxu0 0.0
        %1502 = vmatpush2.msra.mxu0 %v1386
        %1503 = vmatprep.subr.mxu0 0.0
        %1504 = vmatpush2.msra.mxu0 %v1385
        %1505 = vmatprep.subr.mxu0 0.0
        %1506 = vmatpush2.msra.mxu0 %v1384
        %1507 = vmatprep.subr.mxu0 0.0
        %1508 = vmatpush2.msra.mxu0 %v1383
        %1509 = vmatprep.subr.mxu0 0.0
        %1510 = vmatpush2.msra.mxu0 %v1382
        %1511 = vmatprep.subr.mxu0 0.0
        %1512 = vmatpush2.msra.mxu0 %v1381
        %1513 = vmatprep.subr.mxu0 0.0
        %1514 = vmatpush2.msra.mxu0 %v1380
        %1515 = vmatprep.subr.mxu0 0.0
        %1516 = vmatpush2.msra.mxu0 %v1379
        %1517 = vmatprep.subr.mxu0 0.0
        %1518 = vmatpush2.msra.mxu0 %v1378
        %1519 = vmatprep.subr.mxu0 0.0
        %1520 = vmatpush2.msra.mxu0 %v1377
        %1521 = vmatprep.subr.mxu0 0.0
        %1522 = vmatpush2.msra.mxu0 %v1376
        %1523 = vmatprep.subr.mxu0 0.0
        %1524 = vmatpush2.msra.mxu0 %v1375
        %1525 = vmatprep.mubr.f32.mxu0 %v1324
        %1526 = vmatmul.mubr.f32.gmra.mxu0 %v1169
        %v1527 = vpop.f32.mrf.mxu0
        %v1528 = vadd.f32 %v1458, %v1527
        %v1529 = vpop.f32.mrf.mxu0
        %1530 = vdwg.mxu0
        %1531 = vst [vmem:[%s216] sm:$0xff] %v1528
        %s1532 = sand.u32 %s97, 1
        %s1533 = scalar_lea.sflag [#allocation4], %s1532
        %s1534 = sand.u32 %s97, 1
        %s1535 = smul.addr %s1534, 8
        %s1536 = scalar_lea.vmem [#allocation8], %s1535
        // Predicated region
        $region45: #{tpu_custom_call.1} parent=31 // pred_check
          %p1537 = pneg %p107
        $region46: #{tpu_custom_call.1} parent=31 // pred_check_branch
          %1539 = sbr.rel (%p1537) target = $region48
        $region47: #{tpu_custom_call.1} parent=31 // pred_region
          %s1541 = ssub.s32 128, 128
          %1542 = vsyncadd %s1533, %s1541
          %s1543 = smul.addr %s21, 128
          %s1544 = scalar_lea.hbm %s3, %s1543
          %s1546 = sshll.u32 %s1536, 4
          %s1547 = int_to_ptr.vmem [resolvable:$true] %s1546
          %1549 = dma.vmem_to_hbm [thread:$0]  %s1547, 128, %s1544, %s1533
        $region48: #{tpu_custom_call.1} parent=31 // pred_fallthru
          _
      $region32: #{tpu_custom_call.1} parent=5 // pred_fallthru
        _
      %p1550 = scmp.le.s32.totalorder 2, %s16
      // Predicated region
      $region49: #{tpu_custom_call.1} parent=5 // pred_check
        %p1551 = pneg %p1550
      $region50: #{tpu_custom_call.1} parent=5 // pred_check_branch
        %1553 = sbr.rel (%p1551) target = $region52
      $region51: #{tpu_custom_call.1} parent=5 // pred_region
        %s1554 = ssub.s32 %s16, 2
        // Predicated region
        $region53: #{tpu_custom_call.1} parent=51 // pred_check
          %p1555 = pneg %p113
        $region54: #{tpu_custom_call.1} parent=51 // pred_check_branch
          %1557 = sbr.rel (%p1555) target = $region56
        $region55: #{tpu_custom_call.1} parent=51 // pred_region
          %s1558 = sand.u32 %s98, 1
          %s1559 = scalar_lea.sflag [#allocation4], %s1558
          %s1560 = sand.u32 %s98, 1
          %s1561 = smul.addr %s1560, 8
          %s1562 = scalar_lea.vmem [#allocation8], %s1561
          %1563 = dma.done %s1559, 128
        $region56: #{tpu_custom_call.1} parent=51 // pred_fallthru
          _
      $region52: #{tpu_custom_call.1} parent=5 // pred_fallthru
        _
    $region6: #{tpu_custom_call.1} parent=1 // loop_footer
      %s20 = sadd.s32 1, %s16
    $region7: #{tpu_custom_call.1} parent=1 // loop_footer_branch
      %15 = sbr.rel target = $region3
    $region8: #{tpu_custom_call.1} parent=1 // loop_exit
      _
    %1564 = vsyncpa [#allocation3], 1
    %s1565 = scalar_lea.sflag [#allocation3], 1
    %1566 = vsyncpa %s1565, 1
    %1567 = vsyncpa [#allocation6], 1
    %1568 = vsyncpa [#allocation4], 1
    %s1569 = scalar_lea.sflag [#allocation4], 1
    %1570 = vsyncpa %s1569, 1

</llo_original>
